<compile_context>
chip_gen: v6e
topology: v6e:2x2x1
jax: 0.10.0
libtpu: 0.0.40
codegen_flags: <defaults>
</compile_context>

<pallas_src>
import math
from functools import partial

import jax
import jax.numpy as jnp
from jax import lax
from jax.experimental import pallas as pl
from jax.experimental.pallas import tpu as pltpu


# ---------------------------------------------------------------------------
# Fused kernel: one grid step = (batch element, spatial tile).
#   psi_r = W @ P_r   psi_i = W @ P_i   chi = W @ P_a        (K = kH*kW*Cin)
#   m     = 0.5*|psi| + 0.5*chi + magnitude_bias
#   phi   = stable_angle(psi) + phase_bias
# Outputs are written channel-first, spatially flat: (1, Cout, M_tile).
# ---------------------------------------------------------------------------
def _fused_ctconv_kernel(pr_ref, pi_ref, pa_ref, w_ref, mb_ref, pb_ref,
                         m_ref, phi_ref, *, eps):
    w = w_ref[...]                                                       # (Cout, K) bf16
    psi_r = jnp.dot(w, pr_ref[0], preferred_element_type=jnp.float32)   # (Cout, TM) f32
    psi_i = jnp.dot(w, pi_ref[0], preferred_element_type=jnp.float32)
    chi   = jnp.dot(w, pa_ref[0], preferred_element_type=jnp.float32)

    mb = mb_ref[...]                                                     # (Cout, 1) f32
    pb = pb_ref[...]

    mag = jnp.sqrt(psi_r * psi_r + psi_i * psi_i)
    # get_stable_angle: imaginary parts strictly inside (-eps, eps) are set to +eps.
    psi_i_safe = jnp.where((psi_i < eps) & (psi_i > -eps), jnp.float32(eps), psi_i)
    phi = jnp.arctan2(psi_i_safe, psi_r) + pb

    m_ref[...] = (0.5 * mag + 0.5 * chi + mb)[None]                      # (1, Cout, TM)
    phi_ref[...] = phi[None]


def _choose_m_tile(M, cap=4096):
    """Largest lane-aligned tile (multiple of 128) dividing M, capped; else full M."""
    if M <= cap:
        return M
    for t in range(cap - cap % 128, 127, -128):
        if M % t == 0:
            return t
    return M


def _fused_transposed_conv(p_r, p_i, p_a, w_mat, mb, pb, *, eps):
    """p_*: (N, K, M) bf16 im2col, w_mat: (Cout, K) bf16, mb/pb: (Cout, 1) f32."""
    N, K, M = p_r.shape
    Cout = w_mat.shape[0]
    TM = _choose_m_tile(M)
    grid = (N, M // TM)

    p_spec = pl.BlockSpec((1, K, TM), lambda n, mt: (n, 0, mt))
    out_spec = pl.BlockSpec((1, Cout, TM), lambda n, mt: (n, 0, mt))
    w_spec = pl.BlockSpec((Cout, K), lambda n, mt: (0, 0))
    b_spec = pl.BlockSpec((Cout, 1), lambda n, mt: (0, 0))

    return pl.pallas_call(
        partial(_fused_ctconv_kernel, eps=eps),
        out_shape=(jax.ShapeDtypeStruct((N, Cout, M), jnp.float32),
                   jax.ShapeDtypeStruct((N, Cout, M), jnp.float32)),
        grid_spec=pltpu.PrefetchScalarGridSpec(
            num_scalar_prefetch=0,
            grid=grid,
            in_specs=[p_spec, p_spec, p_spec, w_spec, b_spec, b_spec],
            out_specs=(out_spec, out_spec),
        ),
        compiler_params=pltpu.CompilerParams(
            dimension_semantics=("parallel", "parallel")),
    )(p_r, p_i, p_a, w_mat, mb, pb)


# ---------------------------------------------------------------------------
# Module wrapper (PyTorch-compatible NCHW complex in, two NCHW float32 out).
# ---------------------------------------------------------------------------
class ComplexConvTranspose2d:
    def __init__(self, n_in_channels, n_out_channels, kernel_size,
                 stride=1, padding=0, output_padding=0, *, key):
        self.n_in = n_in_channels
        self.n_out = n_out_channels
        self.kH = self.kW = int(kernel_size)
        self.stride = int(stride)
        self.padding = int(padding)
        self.output_padding = int(output_padding)

        kw_key, mb_key = jax.random.split(key)
        # ConvTranspose2d weight: (C_in, C_out, kH, kW), uniform init (deterministic).
        w_bound = 1.0 / math.sqrt(n_in_channels * self.kH * self.kW)
        self.weight = jax.random.uniform(
            kw_key, (n_in_channels, n_out_channels, self.kH, self.kW),
            jnp.float32, minval=-w_bound, maxval=w_bound)

        fan_in = n_out_channels * self.kH * self.kW
        b_bound = 1.0 / math.sqrt(fan_in)
        self.magnitude_bias = jax.random.uniform(
            mb_key, (1, n_out_channels, 1, 1), jnp.float32,
            minval=-b_bound, maxval=b_bound)
        self.phase_bias = jnp.zeros((1, n_out_channels, 1, 1), jnp.float32)

    def __call__(self, x):
        """x: complex (N, C_in, H, W)  ->  (m, phi_psi), each float32 (N, C_out, Hout, Wout)."""
        N, Cin, H, W = x.shape
        s, p, op = self.stride, self.padding, self.output_padding
        kH, kW = self.kH, self.kW
        Cout = self.n_out
        Hout = (H - 1) * s - 2 * p + kH + op
        Wout = (W - 1) * s - 2 * p + kW + op
        M = Hout * Wout
        K = kH * kW * Cin

        # The three real-valued conv inputs, stacked on the batch axis (NCHW, bf16).
        xr = jnp.real(x).astype(jnp.float32)
        xi = jnp.imag(x).astype(jnp.float32)
        xa = jnp.abs(x).astype(jnp.float32)
        xb = jnp.concatenate([xr, xi, xa], axis=0).astype(jnp.bfloat16)   # (3N, Cin, H, W)

        # Transposed conv == zero-insertion (interior pad) + (possibly negative) edge pad
        # + stride-1 VALID correlation with the spatially flipped kernel.
        pad_cfg = [(0, 0, 0), (0, 0, 0),
                   (kH - 1 - p, kH - 1 - p + op, s - 1),
                   (kW - 1 - p, kW - 1 - p + op, s - 1)]
        xp = lax.pad(xb, jnp.array(0, dtype=xb.dtype), pad_cfg)          # (3N, Cin, Hp, Wp)

        # im2col: taps concatenated into a single K axis (built by XLA in the wrapper).
        # TODO(synk): a kernel-side DMA im2col or stride-phase (sub-pixel) decomposition
        # would avoid the kH*kW HBM blow-up and the multiplies against dilation zeros.
        taps = [xp[:, :, kh:kh + Hout, kw:kw + Wout]
                for kh in range(kH) for kw in range(kW)]                  # (3N, Cin, Hout, Wout)
        P = jnp.stack(taps, axis=1)                                       # (3N, kH*kW, Cin, Hout, Wout)
        P = P.reshape(3 * N, K, M)                                        # k = (kh, kw, ci), ci fastest
        p_r, p_i, p_a = P[:N], P[N:2 * N], P[2 * N:]

        # Weight (Cin, Cout, kH, kW) -> flipped -> (Cout, kH, kW, Cin) -> (Cout, K).
        w_mat = jnp.transpose(self.weight[:, :, ::-1, ::-1], (1, 2, 3, 0))
        w_mat = w_mat.reshape(Cout, K).astype(jnp.bfloat16)

        mb = self.magnitude_bias.reshape(Cout, 1)
        pb = self.phase_bias.reshape(Cout, 1)

        m_flat, phi_flat = _fused_transposed_conv(p_r, p_i, p_a, w_mat, mb, pb, eps=1e-8)

        # Channel-first flat -> NCHW is a pure reshape (no transpose needed).
        m = m_flat.reshape(N, Cout, Hout, Wout)
        phi = phi_flat.reshape(N, Cout, Hout, Wout)
        return m, phi


# ---------------------------------------------------------------------------
if __name__ == "__main__":
    key = jax.random.PRNGKey(0)
    k_mod, k_r, k_i = jax.random.split(key, 3)

    N, Cin, H, W = 2, 4, 16, 16
    Cout, ksize, stride, pad, out_pad = 4, 3, 2, 1, 1     # 16x16 -> 32x32

    mod = ComplexConvTranspose2d(Cin, Cout, ksize, stride, pad, out_pad, key=k_mod)

    xr = jax.random.normal(k_r, (N, Cin, H, W), jnp.float32)
    xi = jax.random.normal(k_i, (N, Cin, H, W), jnp.float32)
    x = (xr + 1j * xi).astype(jnp.complex64)

    m, phi = mod(x)
    jax.block_until_ready((m, phi))

    Hout = (H - 1) * stride - 2 * pad + ksize + out_pad
    assert m.shape == (N, Cout, Hout, Hout), m.shape
    assert phi.shape == (N, Cout, Hout, Hout), phi.shape

    # --- pure-JAX reference (same bf16-quantized operands, f32 accumulation) ---
    def convT_ref(a_nchw):
        a = a_nchw.astype(jnp.bfloat16)
        w_oihw = jnp.transpose(mod.weight[:, :, ::-1, ::-1], (1, 0, 2, 3)).astype(jnp.bfloat16)
        return lax.conv_general_dilated(
            a, w_oihw, window_strides=(1, 1),
            padding=[(ksize - 1 - pad, ksize - 1 - pad + out_pad)] * 2,
            lhs_dilation=(stride, stride),
            dimension_numbers=("NCHW", "OIHW", "NCHW"),
            preferred_element_type=jnp.float32)

    psi_r = convT_ref(jnp.real(x))
    psi_i = convT_ref(jnp.imag(x))
    chi = convT_ref(jnp.abs(x))
    eps = 1e-8
    mag_ref = jnp.sqrt(psi_r * psi_r + psi_i * psi_i)
    psi_i_safe = jnp.where((psi_i < eps) & (psi_i > -eps), jnp.float32(eps), psi_i)
    m_ref = 0.5 * mag_ref + 0.5 * chi + mod.magnitude_bias
    phi_ref = jnp.arctan2(psi_i_safe, psi_r) + mod.phase_bias

    assert jnp.allclose(m, m_ref, atol=5e-3, rtol=5e-3), \
        ("m mismatch", float(jnp.max(jnp.abs(m - m_ref))))
    # Compare angles modulo 2*pi, away from the ill-conditioned |psi| ~ 0 region.
    dphi = jnp.abs(jnp.arctan2(jnp.sin(phi - phi_ref), jnp.cos(phi - phi_ref)))
    well_cond = mag_ref > 3e-2
    assert float(jnp.max(jnp.where(well_cond, dphi, 0.0))) < 5e-2, "phi mismatch"

    print("KERNEL_OK")
</pallas_src>

<mosaic_0001>
module attributes {stable_mosaic.version = 11 : i64} {
  func.func @_fused_ctconv_kernel(%arg0: i32, %arg1: i32, %arg2: memref<1x36x1024xbf16, #tpu.memory_space<vmem>>, %arg3: memref<1x36x1024xbf16, #tpu.memory_space<vmem>>, %arg4: memref<1x36x1024xbf16, #tpu.memory_space<vmem>>, %arg5: memref<4x36xbf16, #tpu.memory_space<vmem>>, %arg6: memref<4x1xf32, #tpu.memory_space<vmem>>, %arg7: memref<4x1xf32, #tpu.memory_space<vmem>>, %arg8: memref<1x4x1024xf32, #tpu.memory_space<vmem>>, %arg9: memref<1x4x1024xf32, #tpu.memory_space<vmem>>) attributes {dimension_semantics = [#tpu.dimension_semantics<parallel>, #tpu.dimension_semantics<parallel>], iteration_bounds = array<i64: 2, 1>, scalar_prefetch = 0 : i64, scratch_operands = 0 : i64, tpu.core_type = #tpu.core_type<tc>, window_params = [{transform_indices = @transform_0, window_bounds = array<i64: 1, 36, 1024>}, {transform_indices = @transform_1, window_bounds = array<i64: 1, 36, 1024>}, {transform_indices = @transform_2, window_bounds = array<i64: 1, 36, 1024>}, {pipeline_mode = #tpu.pipeline_mode<synchronous>, transform_indices = @transform_3, window_bounds = array<i64: 4, 36>}, {pipeline_mode = #tpu.pipeline_mode<synchronous>, transform_indices = @transform_4, window_bounds = array<i64: 4, 1>}, {pipeline_mode = #tpu.pipeline_mode<synchronous>, transform_indices = @transform_5, window_bounds = array<i64: 4, 1>}, {transform_indices = @transform_6, window_bounds = array<i64: 1, 4, 1024>}, {transform_indices = @transform_7, window_bounds = array<i64: 1, 4, 1024>}]} {
    %c0 = arith.constant 0 : index
    %c0_0 = arith.constant 0 : index
    %0 = vector.load %arg5[%c0, %c0_0] : memref<4x36xbf16, #tpu.memory_space<vmem>>, vector<4x36xbf16>
    %c0_1 = arith.constant 0 : index
    %c0_2 = arith.constant 0 : index
    %c0_3 = arith.constant 0 : index
    %1 = vector.load %arg2[%c0_1, %c0_2, %c0_3] : memref<1x36x1024xbf16, #tpu.memory_space<vmem>>, vector<1x36x1024xbf16>
    %2 = vector.shape_cast %1 : vector<1x36x1024xbf16> to vector<36x1024xbf16>
    %cst = arith.constant dense<0.000000e+00> : vector<4x1024xf32>
    %3 = tpu.matmul %0, %2, %cst {dimension_numbers = #tpu.dot_dimension_numbers<[1], [0], [0], [1], [0, 0, 1, 1], [], []>} : vector<4x36xbf16>, vector<36x1024xbf16>, vector<4x1024xf32> -> vector<4x1024xf32>
    %c0_4 = arith.constant 0 : index
    %c0_5 = arith.constant 0 : index
    %c0_6 = arith.constant 0 : index
    %4 = vector.load %arg3[%c0_4, %c0_5, %c0_6] : memref<1x36x1024xbf16, #tpu.memory_space<vmem>>, vector<1x36x1024xbf16>
    %5 = vector.shape_cast %4 : vector<1x36x1024xbf16> to vector<36x1024xbf16>
    %cst_7 = arith.constant dense<0.000000e+00> : vector<4x1024xf32>
    %6 = tpu.matmul %0, %5, %cst_7 {dimension_numbers = #tpu.dot_dimension_numbers<[1], [0], [0], [1], [0, 0, 1, 1], [], []>} : vector<4x36xbf16>, vector<36x1024xbf16>, vector<4x1024xf32> -> vector<4x1024xf32>
    %c0_8 = arith.constant 0 : index
    %c0_9 = arith.constant 0 : index
    %c0_10 = arith.constant 0 : index
    %7 = vector.load %arg4[%c0_8, %c0_9, %c0_10] : memref<1x36x1024xbf16, #tpu.memory_space<vmem>>, vector<1x36x1024xbf16>
    %8 = vector.shape_cast %7 : vector<1x36x1024xbf16> to vector<36x1024xbf16>
    %cst_11 = arith.constant dense<0.000000e+00> : vector<4x1024xf32>
    %9 = tpu.matmul %0, %8, %cst_11 {dimension_numbers = #tpu.dot_dimension_numbers<[1], [0], [0], [1], [0, 0, 1, 1], [], []>} : vector<4x36xbf16>, vector<36x1024xbf16>, vector<4x1024xf32> -> vector<4x1024xf32>
    %c0_12 = arith.constant 0 : index
    %c0_13 = arith.constant 0 : index
    %10 = vector.load %arg6[%c0_12, %c0_13] : memref<4x1xf32, #tpu.memory_space<vmem>>, vector<4x1xf32>
    %c0_14 = arith.constant 0 : index
    %c0_15 = arith.constant 0 : index
    %11 = vector.load %arg7[%c0_14, %c0_15] : memref<4x1xf32, #tpu.memory_space<vmem>>, vector<4x1xf32>
    %12 = arith.mulf %3, %3 : vector<4x1024xf32>
    %13 = arith.mulf %6, %6 : vector<4x1024xf32>
    %14 = arith.addf %12, %13 : vector<4x1024xf32>
    %15 = math.sqrt %14 : vector<4x1024xf32>
    %cst_16 = arith.constant 9.99999993E-9 : f32
    %16 = vector.broadcast %cst_16 : f32 to vector<4x1024xf32>
    %17 = arith.cmpf olt, %6, %16 : vector<4x1024xf32>
    %cst_17 = arith.constant -9.99999993E-9 : f32
    %18 = vector.broadcast %cst_17 : f32 to vector<4x1024xf32>
    %19 = arith.cmpf ogt, %6, %18 : vector<4x1024xf32>
    %20 = arith.andi %17, %19 : vector<4x1024xi1>
    %cst_18 = arith.constant 9.99999993E-9 : f32
    %21 = vector.broadcast %cst_18 : f32 to vector<4x1024xf32>
    %22 = arith.select %20, %21, %6 : vector<4x1024xi1>, vector<4x1024xf32>
    %23 = math.atan2 %22, %3 : vector<4x1024xf32>
    %24 = vector.broadcast %11 : vector<4x1xf32> to vector<4x1024xf32>
    %25 = arith.addf %23, %24 : vector<4x1024xf32>
    %cst_19 = arith.constant 5.000000e-01 : f32
    %26 = vector.broadcast %cst_19 : f32 to vector<4x1024xf32>
    %27 = arith.mulf %26, %15 : vector<4x1024xf32>
    %cst_20 = arith.constant 5.000000e-01 : f32
    %28 = vector.broadcast %cst_20 : f32 to vector<4x1024xf32>
    %29 = arith.mulf %28, %9 : vector<4x1024xf32>
    %30 = arith.addf %27, %29 : vector<4x1024xf32>
    %31 = vector.broadcast %10 : vector<4x1xf32> to vector<4x1024xf32>
    %32 = arith.addf %30, %31 : vector<4x1024xf32>
    %33 = vector.shape_cast %32 : vector<4x1024xf32> to vector<1x4x1024xf32>
    %c0_21 = arith.constant 0 : index
    %c0_22 = arith.constant 0 : index
    %c0_23 = arith.constant 0 : index
    %34 = vector.load %arg8[%c0_21, %c0_22, %c0_23] : memref<1x4x1024xf32, #tpu.memory_space<vmem>>, vector<1x4x1024xf32>
    tpu.vector_store %arg8[%c0_21, %c0_22, %c0_23], %33 {strides = array<i32>} : memref<1x4x1024xf32, #tpu.memory_space<vmem>>, vector<1x4x1024xf32>,
    %35 = vector.shape_cast %25 : vector<4x1024xf32> to vector<1x4x1024xf32>
    %c0_24 = arith.constant 0 : index
    %c0_25 = arith.constant 0 : index
    %c0_26 = arith.constant 0 : index
    %36 = vector.load %arg9[%c0_24, %c0_25, %c0_26] : memref<1x4x1024xf32, #tpu.memory_space<vmem>>, vector<1x4x1024xf32>
    tpu.vector_store %arg9[%c0_24, %c0_25, %c0_26], %35 {strides = array<i32>} : memref<1x4x1024xf32, #tpu.memory_space<vmem>>, vector<1x4x1024xf32>,
    return
  }
  func.func @transform_0(%arg0: i32, %arg1: i32) -> (i32, i32, i32) {
    %c0_i32 = arith.constant 0 : i32
    %c0_i32_0 = arith.constant 0 : i32
    return %arg0, %c0_i32, %arg1 : i32, i32, i32
  }
  func.func @transform_1(%arg0: i32, %arg1: i32) -> (i32, i32, i32) {
    %c0_i32 = arith.constant 0 : i32
    %c0_i32_0 = arith.constant 0 : i32
    return %arg0, %c0_i32, %arg1 : i32, i32, i32
  }
  func.func @transform_2(%arg0: i32, %arg1: i32) -> (i32, i32, i32) {
    %c0_i32 = arith.constant 0 : i32
    %c0_i32_0 = arith.constant 0 : i32
    return %arg0, %c0_i32, %arg1 : i32, i32, i32
  }
  func.func @transform_3(%arg0: i32, %arg1: i32) -> (i32, i32) {
    %c0_i32 = arith.constant 0 : i32
    %c0_i32_0 = arith.constant 0 : i32
    %c0_i32_1 = arith.constant 0 : i32
    return %c0_i32, %c0_i32_0 : i32, i32
  }
  func.func @transform_4(%arg0: i32, %arg1: i32) -> (i32, i32) {
    %c0_i32 = arith.constant 0 : i32
    %c0_i32_0 = arith.constant 0 : i32
    %c0_i32_1 = arith.constant 0 : i32
    return %c0_i32, %c0_i32_0 : i32, i32
  }
  func.func @transform_5(%arg0: i32, %arg1: i32) -> (i32, i32) {
    %c0_i32 = arith.constant 0 : i32
    %c0_i32_0 = arith.constant 0 : i32
    %c0_i32_1 = arith.constant 0 : i32
    return %c0_i32, %c0_i32_0 : i32, i32
  }
  func.func @transform_6(%arg0: i32, %arg1: i32) -> (i32, i32, i32) {
    %c0_i32 = arith.constant 0 : i32
    %c0_i32_0 = arith.constant 0 : i32
    return %arg0, %c0_i32, %arg1 : i32, i32, i32
  }
  func.func @transform_7(%arg0: i32, %arg1: i32) -> (i32, i32, i32) {
    %c0_i32 = arith.constant 0 : i32
    %c0_i32_0 = arith.constant 0 : i32
    return %arg0, %c0_i32, %arg1 : i32, i32, i32
  }
}

</mosaic_0001>

<llo_original>
// kernel: tpu_custom_call.1
$region0: #{tpu_custom_call.1}
  #allocation0 [shape = 'u32[]', space=smem, size = 0x4, offset = 0x4, fixed_abs, tag = 'smem constant byte address 0x4 - core index']
  #allocation1 [shape = 'u32[144,128]{1,0:T(1,128)}', space=vmem, size = 0x12000, scoped, tag = 'internal scratch']
  %s0 = inlined_call_operand.vmem [shape: bf16[2,36,1024], index: 0, kind: input, shape index: {}]
  %s1 = inlined_call_operand.vmem [shape: bf16[2,36,1024], index: 1, kind: input, shape index: {}]
  %s2 = inlined_call_operand.vmem [shape: bf16[2,36,1024], index: 2, kind: input, shape index: {}]
  %s3 = inlined_call_operand.vmem [shape: bf16[4,36], index: 3, kind: input, shape index: {}]
  %s4 = inlined_call_operand.vmem [shape: f32[4,1], index: 4, kind: input, shape index: {}]
  %s5 = inlined_call_operand.vmem [shape: f32[4,1], index: 5, kind: input, shape index: {}]
  %s6 = inlined_call_operand.hbm [shape: f32[2,4,1024], index: 6, kind: output, shape index: {0}]
  %s7 = inlined_call_operand.hbm [shape: f32[2,4,1024], index: 7, kind: output, shape index: {1}]
  %8 = xla_tuple %s6, %s7
  %s9 = sld [smem:[#allocation0]]
  $region65: #{tpu_custom_call.1} parent=0
    _
  %s11 = ssub.s32 1, %s9
  %s12 = scalar_select 0, %s11, %s9
  $region1: #{tpu_custom_call.1} parent=0
    #allocation2 [shape = 'u8[32768]{0}', space=vmem, size = 0x8000, scoped, tag = 'output window, operand 0']
    #allocation3 [shape = 's32[2]{0}', space=sflag, size = 0x8, scoped, tag = 'scoped memory for tpu_custom_call.1']
    #allocation4 [shape = 'u8[32768]{0}', space=vmem, size = 0x8000, scoped, tag = 'output window, operand 1']
    #allocation5 [shape = 's32[2]{0}', space=sflag, size = 0x8, scoped, tag = 'scoped memory for tpu_custom_call.1']
    %13 = vsyncpa [#allocation3], 0
    %s14 = scalar_lea.sflag [#allocation3], 1
    %15 = vsyncpa %s14, 0
    %16 = vsyncpa [#allocation5], 0
    %s17 = scalar_lea.sflag [#allocation5], 1
    %18 = vsyncpa %s17, 0
    loop: start=0, step=1, limit=4
    $region2: #{tpu_custom_call.1} parent=1 // loop_pre_header
      _
    $region3: #{tpu_custom_call.1} parent=1 // loop_header
      %s20 = sphi 0, %s24
      %p21 = scmp.ge.s32.totalorder %s20, 4
      %s27 = sphi 0, %s39
      %s28 = sphi 0, %s35
      %s29 = sphi 0, %s27
      %s30 = sphi 0, %s28
      %s31 = sphi 0, %s29
      %s32 = sphi 0, %s30
      %s44 = sphi 0, %s46
      %s47 = sphi 0, %s44
      %s48 = sphi 0, %s47
      %s64 = sphi 0, %s48
      %s72 = sphi 0, %s74
      %s75 = sphi 0, %s72
      %s76 = sphi 0, %s75
      %s92 = sphi 0, %s76
      %s100 = sphi 0, %s102
      %s103 = sphi 0, %s100
      %s104 = sphi 0, %s103
      %s120 = sphi 0, %s104
      %s124 = sphi 0, %s124
      %s126 = sphi 0, %s124
      %s127 = sphi 0, %s126
      %s141 = sphi 0, %s127
      %s145 = sphi 0, %s145
      %s147 = sphi 0, %s145
      %s148 = sphi 0, %s147
      %s162 = sphi 0, %s148
      %s166 = sphi 0, %s166
      %s168 = sphi 0, %s166
      %s169 = sphi 0, %s168
      %s183 = sphi 0, %s169
      %s191 = sphi 0, %s193
      %s194 = sphi 0, %s191
      %s195 = sphi 0, %s194
      %s211 = sphi 0, %s195
      %s219 = sphi 0, %s221
      %s222 = sphi 0, %s219
      %s223 = sphi 0, %s222
      %s239 = sphi 0, %s223
    $region4: #{tpu_custom_call.1} parent=1 // loop_header_branch
      %23 = sbr.rel (%p21) target = $region8
    $region5: #{tpu_custom_call.1} parent=1 // loop_body
      %s25 = ssub.s32 %s20, 1
      %s26 = ssub.s32 %s20, 2
      %s33 = sadd.s32 1, %s28
      %p34 = scmp.ge.s32.totalorder %s33, 1
      %s35 = scalar_select %p34, 0, %s33
      %s36 = sadd.s32 1, %s27
      %s37 = scalar_select %p34, %s36, %s27
      %p38 = scmp.ge.s32.totalorder %s37, 2
      %s39 = scalar_select %p38, 0, %s37
      %s40 = ssub.s32 %s27, %s39
      %s41 = ssub.s32 %s28, %s35
      %s42 = sor.u32 %s40, %s41
      %p43 = scmp.eq.s32.totalorder %s42, 0
      %s45 = sadd.s32 %s44, 1
      %s46 = scalar_select %p43, %s44, %s45
      %p49 = pneg %p43
      %p50 = scmp.eq.s32.totalorder %s20, 1
      %p51 = por %p49, %p50
      %p52 = scmp.ne.s32.totalorder %s44, %s47
      %p53 = scmp.eq.s32.totalorder %s20, 0
      %p54 = por %p52, %p53
      %p55 = scmp.ne.s32.totalorder %s44, %s47
      %p56 = scmp.eq.s32.totalorder %s25, 1
      %p57 = por %p55, %p56
      %p58 = scmp.ne.s32.totalorder %s47, %s48
      %p59 = scmp.eq.s32.totalorder %s25, 0
      %p60 = por %p58, %p59
      %p61 = scmp.ne.s32.totalorder %s47, %s48
      %p62 = scmp.eq.s32.totalorder %s26, 1
      %p63 = por %p61, %p62
      %p65 = scmp.ne.s32.totalorder %s48, %s64
      %p66 = scmp.eq.s32.totalorder %s26, 0
      %p67 = por %p65, %p66
      %s68 = ssub.s32 %s27, %s39
      %s69 = ssub.s32 %s28, %s35
      %s70 = sor.u32 %s68, %s69
      %p71 = scmp.eq.s32.totalorder %s70, 0
      %s73 = sadd.s32 %s72, 1
      %s74 = scalar_select %p71, %s72, %s73
      %p77 = pneg %p71
      %p78 = scmp.eq.s32.totalorder %s20, 1
      %p79 = por %p77, %p78
      %p80 = scmp.ne.s32.totalorder %s72, %s75
      %p81 = scmp.eq.s32.totalorder %s20, 0
      %p82 = por %p80, %p81
      %p83 = scmp.ne.s32.totalorder %s72, %s75
      %p84 = scmp.eq.s32.totalorder %s25, 1
      %p85 = por %p83, %p84
      %p86 = scmp.ne.s32.totalorder %s75, %s76
      %p87 = scmp.eq.s32.totalorder %s25, 0
      %p88 = por %p86, %p87
      %p89 = scmp.ne.s32.totalorder %s75, %s76
      %p90 = scmp.eq.s32.totalorder %s26, 1
      %p91 = por %p89, %p90
      %p93 = scmp.ne.s32.totalorder %s76, %s92
      %p94 = scmp.eq.s32.totalorder %s26, 0
      %p95 = por %p93, %p94
      %s96 = ssub.s32 %s27, %s39
      %s97 = ssub.s32 %s28, %s35
      %s98 = sor.u32 %s96, %s97
      %p99 = scmp.eq.s32.totalorder %s98, 0
      %s101 = sadd.s32 %s100, 1
      %s102 = scalar_select %p99, %s100, %s101
      %p105 = pneg %p99
      %p106 = scmp.eq.s32.totalorder %s20, 1
      %p107 = por %p105, %p106
      %p108 = scmp.ne.s32.totalorder %s100, %s103
      %p109 = scmp.eq.s32.totalorder %s20, 0
      %p110 = por %p108, %p109
      %p111 = scmp.ne.s32.totalorder %s100, %s103
      %p112 = scmp.eq.s32.totalorder %s25, 1
      %p113 = por %p111, %p112
      %p114 = scmp.ne.s32.totalorder %s103, %s104
      %p115 = scmp.eq.s32.totalorder %s25, 0
      %p116 = por %p114, %p115
      %p117 = scmp.ne.s32.totalorder %s103, %s104
      %p118 = scmp.eq.s32.totalorder %s26, 1
      %p119 = por %p117, %p118
      %p121 = scmp.ne.s32.totalorder %s104, %s120
      %p122 = scmp.eq.s32.totalorder %s26, 0
      %p123 = por %p121, %p122
      %s125 = sadd.s32 %s124, 1
      %p128 = scmp.eq.s32.totalorder %s20, 1
      %p129 = scmp.ne.s32.totalorder %s124, %s126
      %p130 = scmp.eq.s32.totalorder %s20, 0
      %p131 = por %p129, %p130
      %p132 = scmp.ne.s32.totalorder %s124, %s126
      %p133 = scmp.eq.s32.totalorder %s25, 1
      %p134 = por %p132, %p133
      %p135 = scmp.ne.s32.totalorder %s126, %s127
      %p136 = scmp.eq.s32.totalorder %s25, 0
      %p137 = por %p135, %p136
      %p138 = scmp.ne.s32.totalorder %s126, %s127
      %p139 = scmp.eq.s32.totalorder %s26, 1
      %p140 = por %p138, %p139
      %p142 = scmp.ne.s32.totalorder %s127, %s141
      %p143 = scmp.eq.s32.totalorder %s26, 0
      %p144 = por %p142, %p143
      %s146 = sadd.s32 %s145, 1
      %p149 = scmp.eq.s32.totalorder %s20, 1
      %p150 = scmp.ne.s32.totalorder %s145, %s147
      %p151 = scmp.eq.s32.totalorder %s20, 0
      %p152 = por %p150, %p151
      %p153 = scmp.ne.s32.totalorder %s145, %s147
      %p154 = scmp.eq.s32.totalorder %s25, 1
      %p155 = por %p153, %p154
      %p156 = scmp.ne.s32.totalorder %s147, %s148
      %p157 = scmp.eq.s32.totalorder %s25, 0
      %p158 = por %p156, %p157
      %p159 = scmp.ne.s32.totalorder %s147, %s148
      %p160 = scmp.eq.s32.totalorder %s26, 1
      %p161 = por %p159, %p160
      %p163 = scmp.ne.s32.totalorder %s148, %s162
      %p164 = scmp.eq.s32.totalorder %s26, 0
      %p165 = por %p163, %p164
      %s167 = sadd.s32 %s166, 1
      %p170 = scmp.eq.s32.totalorder %s20, 1
      %p171 = scmp.ne.s32.totalorder %s166, %s168
      %p172 = scmp.eq.s32.totalorder %s20, 0
      %p173 = por %p171, %p172
      %p174 = scmp.ne.s32.totalorder %s166, %s168
      %p175 = scmp.eq.s32.totalorder %s25, 1
      %p176 = por %p174, %p175
      %p177 = scmp.ne.s32.totalorder %s168, %s169
      %p178 = scmp.eq.s32.totalorder %s25, 0
      %p179 = por %p177, %p178
      %p180 = scmp.ne.s32.totalorder %s168, %s169
      %p181 = scmp.eq.s32.totalorder %s26, 1
      %p182 = por %p180, %p181
      %p184 = scmp.ne.s32.totalorder %s169, %s183
      %p185 = scmp.eq.s32.totalorder %s26, 0
      %p186 = por %p184, %p185
      %s187 = ssub.s32 %s27, %s39
      %s188 = ssub.s32 %s28, %s35
      %s189 = sor.u32 %s187, %s188
      %p190 = scmp.eq.s32.totalorder %s189, 0
      %s192 = sadd.s32 %s191, 1
      %s193 = scalar_select %p190, %s191, %s192
      %p196 = pneg %p190
      %p197 = scmp.eq.s32.totalorder %s20, 1
      %p198 = por %p196, %p197
      %p199 = scmp.ne.s32.totalorder %s191, %s194
      %p200 = scmp.eq.s32.totalorder %s20, 0
      %p201 = por %p199, %p200
      %p202 = scmp.ne.s32.totalorder %s191, %s194
      %p203 = scmp.eq.s32.totalorder %s25, 1
      %p204 = por %p202, %p203
      %p205 = scmp.ne.s32.totalorder %s194, %s195
      %p206 = scmp.eq.s32.totalorder %s25, 0
      %p207 = por %p205, %p206
      %p208 = scmp.ne.s32.totalorder %s194, %s195
      %p209 = scmp.eq.s32.totalorder %s26, 1
      %p210 = por %p208, %p209
      %p212 = scmp.ne.s32.totalorder %s195, %s211
      %p213 = scmp.eq.s32.totalorder %s26, 0
      %p214 = por %p212, %p213
      %s215 = ssub.s32 %s27, %s39
      %s216 = ssub.s32 %s28, %s35
      %s217 = sor.u32 %s215, %s216
      %p218 = scmp.eq.s32.totalorder %s217, 0
      %s220 = sadd.s32 %s219, 1
      %s221 = scalar_select %p218, %s219, %s220
      %p224 = pneg %p218
      %p225 = scmp.eq.s32.totalorder %s20, 1
      %p226 = por %p224, %p225
      %p227 = scmp.ne.s32.totalorder %s219, %s222
      %p228 = scmp.eq.s32.totalorder %s20, 0
      %p229 = por %p227, %p228
      %p230 = scmp.ne.s32.totalorder %s219, %s222
      %p231 = scmp.eq.s32.totalorder %s25, 1
      %p232 = por %p230, %p231
      %p233 = scmp.ne.s32.totalorder %s222, %s223
      %p234 = scmp.eq.s32.totalorder %s25, 0
      %p235 = por %p233, %p234
      %p236 = scmp.ne.s32.totalorder %s222, %s223
      %p237 = scmp.eq.s32.totalorder %s26, 1
      %p238 = por %p236, %p237
      %p240 = scmp.ne.s32.totalorder %s223, %s239
      %p241 = scmp.eq.s32.totalorder %s26, 0
      %p242 = por %p240, %p241
      %p243 = scmp.le.s32.totalorder 1, %s20
      %p244 = scmp.lt.s32.totalorder %s20, 3
      %p245 = pnand %p243, %p244
      %p246 = pneg %p245
      // Predicated region
      $region9: #{tpu_custom_call.1} parent=5 // pred_check
        _
      $region10: #{tpu_custom_call.1} parent=5 // pred_check_branch
        %248 = sbr.rel (%p245) target = $region12
      $region11: #{tpu_custom_call.1} parent=5 // pred_region
        %s249 = ssub.s32 %s20, 1
        // Predicated region
        $region13: #{tpu_custom_call.1} parent=11 // pred_check
          %p250 = pneg %p137
        $region14: #{tpu_custom_call.1} parent=11 // pred_check_branch
          %252 = sbr.rel (%p250) target = $region16
        $region15: #{tpu_custom_call.1} parent=11 // pred_region
          _
        $region16: #{tpu_custom_call.1} parent=11 // pred_fallthru
          _
        // Predicated region
        $region17: #{tpu_custom_call.1} parent=11 // pred_check
          %p253 = pneg %p158
        $region18: #{tpu_custom_call.1} parent=11 // pred_check_branch
          %255 = sbr.rel (%p253) target = $region20
        $region19: #{tpu_custom_call.1} parent=11 // pred_region
          _
        $region20: #{tpu_custom_call.1} parent=11 // pred_fallthru
          _
        // Predicated region
        $region21: #{tpu_custom_call.1} parent=11 // pred_check
          %p256 = pneg %p179
        $region22: #{tpu_custom_call.1} parent=11 // pred_check_branch
          %258 = sbr.rel (%p256) target = $region24
        $region23: #{tpu_custom_call.1} parent=11 // pred_region
          _
        $region24: #{tpu_custom_call.1} parent=11 // pred_fallthru
          _
      $region12: #{tpu_custom_call.1} parent=5 // pred_fallthru
        _
      %p259 = scmp.lt.s32.totalorder %s20, 2
      // Predicated region
      $region25: #{tpu_custom_call.1} parent=5 // pred_check
        %p260 = pneg %p259
      $region26: #{tpu_custom_call.1} parent=5 // pred_check_branch
        %262 = sbr.rel (%p260) target = $region28
      $region27: #{tpu_custom_call.1} parent=5 // pred_region
        // Predicated region
        $region29: #{tpu_custom_call.1} parent=27 // pred_check
          %p263 = pneg %p54
        $region30: #{tpu_custom_call.1} parent=27 // pred_check_branch
          %265 = sbr.rel (%p263) target = $region32
        $region31: #{tpu_custom_call.1} parent=27 // pred_region
          %s266 = smul.u32 8, %s28
          %p267 = scmp.lt.s32.totalorder %s27, 1
          %s268 = scalar_select %p267, %s27, 1
          %p269 = scmp.lt.s32.totalorder %s266, 7
          %s270 = scalar_select %p269, %s266, 7
          %s271 = smul.addr %s268, 40
          %s272 = sadd.s32 %s270, %s271
          %s273 = smul.addr %s272, 4
          %s274 = scalar_lea.vmem %s0, %s273
          %s275 = smul.u32 8, %s28
        $region32: #{tpu_custom_call.1} parent=27 // pred_fallthru
          _
        // Predicated region
        $region33: #{tpu_custom_call.1} parent=27 // pred_check
          %p276 = pneg %p82
        $region34: #{tpu_custom_call.1} parent=27 // pred_check_branch
          %278 = sbr.rel (%p276) target = $region36
        $region35: #{tpu_custom_call.1} parent=27 // pred_region
          %s279 = smul.u32 8, %s28
          %p280 = scmp.lt.s32.totalorder %s27, 1
          %s281 = scalar_select %p280, %s27, 1
          %p282 = scmp.lt.s32.totalorder %s279, 7
          %s283 = scalar_select %p282, %s279, 7
          %s284 = smul.addr %s281, 40
          %s285 = sadd.s32 %s283, %s284
          %s286 = smul.addr %s285, 4
          %s287 = scalar_lea.vmem %s1, %s286
          %s288 = smul.u32 8, %s28
        $region36: #{tpu_custom_call.1} parent=27 // pred_fallthru
          _
        // Predicated region
        $region37: #{tpu_custom_call.1} parent=27 // pred_check
          %p289 = pneg %p110
        $region38: #{tpu_custom_call.1} parent=27 // pred_check_branch
          %291 = sbr.rel (%p289) target = $region40
        $region39: #{tpu_custom_call.1} parent=27 // pred_region
          %s292 = smul.u32 8, %s28
          %p293 = scmp.lt.s32.totalorder %s27, 1
          %s294 = scalar_select %p293, %s27, 1
          %p295 = scmp.lt.s32.totalorder %s292, 7
          %s296 = scalar_select %p295, %s292, 7
          %s297 = smul.addr %s294, 40
          %s298 = sadd.s32 %s296, %s297
          %s299 = smul.addr %s298, 4
          %s300 = scalar_lea.vmem %s2, %s299
          %s301 = smul.u32 8, %s28
        $region40: #{tpu_custom_call.1} parent=27 // pred_fallthru
          _
      $region28: #{tpu_custom_call.1} parent=5 // pred_fallthru
        _
      %p302 = scmp.le.s32.totalorder 1, %s20
      %p303 = scmp.lt.s32.totalorder %s20, 3
      %p304 = pnand %p302, %p303
      %p305 = pneg %p304
      // Predicated region
      $region41: #{tpu_custom_call.1} parent=5 // pred_check
        _
      $region42: #{tpu_custom_call.1} parent=5 // pred_check_branch
        %307 = sbr.rel (%p304) target = $region44
      $region43: #{tpu_custom_call.1} parent=5 // pred_region
        %s308 = ssub.s32 %s20, 1
        %s309 = smul.u32 8, %s30
        %p310 = scmp.lt.s32.totalorder %s29, 1
        %s311 = scalar_select %p310, %s29, 1
        %p312 = scmp.lt.s32.totalorder %s309, 7
        %s313 = scalar_select %p312, %s309, 7
        %s314 = smul.addr %s311, 40
        %s315 = sadd.s32 %s313, %s314
        %s316 = smul.addr %s315, 4
        %s317 = scalar_lea.vmem %s0, %s316
        %p318 = pneg %p60
        %p319 = pneg %p57
        %s320 = smul.u32 8, %s30
        %p321 = scmp.lt.s32.totalorder %s29, 1
        %s322 = scalar_select %p321, %s29, 1
        %p323 = scmp.lt.s32.totalorder %s320, 7
        %s324 = scalar_select %p323, %s320, 7
        %s325 = smul.addr %s322, 40
        %s326 = sadd.s32 %s324, %s325
        %s327 = smul.addr %s326, 4
        %s328 = scalar_lea.vmem %s1, %s327
        %p329 = pneg %p88
        %p330 = pneg %p85
        %s331 = smul.u32 8, %s30
        %p332 = scmp.lt.s32.totalorder %s29, 1
        %s333 = scalar_select %p332, %s29, 1
        %p334 = scmp.lt.s32.totalorder %s331, 7
        %s335 = scalar_select %p334, %s331, 7
        %s336 = smul.addr %s333, 40
        %s337 = sadd.s32 %s335, %s336
        %s338 = smul.addr %s337, 4
        %s339 = scalar_lea.vmem %s2, %s338
        %p340 = pneg %p116
        %p341 = pneg %p113
        %p342 = pneg %p137
        %p343 = pneg %p134
        %p344 = pneg %p158
        %p345 = pneg %p155
        %p346 = pneg %p179
        %p347 = pneg %p176
        %p348 = pneg %p207
        %p349 = pneg %p204
        %s350 = sand.u32 %s194, 1
        %s351 = scalar_lea.sflag [#allocation3], %s350
        %s352 = sand.u32 %s194, 1
        %s353 = smul.addr %s352, 32
        %s354 = scalar_lea.vmem [#allocation2], %s353
        %p355 = pneg %p235
        %p356 = pneg %p232
        %s357 = sand.u32 %s222, 1
        %s358 = scalar_lea.sflag [#allocation5], %s357
        %s359 = sand.u32 %s222, 1
        %s360 = smul.addr %s359, 32
        %s361 = scalar_lea.vmem [#allocation4], %s360
        %s362 = smul.u32 8, %s30
        %p363 = scmp.lt.s32.totalorder %s29, 1
        %s364 = scalar_select %p363, %s29, 1
        %p365 = scmp.lt.s32.totalorder %s362, 7
        %s366 = scalar_select %p365, %s362, 7
        %s367 = smul.addr %s364, 40
        %s368 = sadd.s32 %s366, %s367
        %s369 = smul.addr %s368, 4
        %s370 = scalar_lea.vmem %s0, %s369
        %s371 = smul.u32 8, %s30
        %s372 = smul.u32 8, %s30
        %p373 = scmp.lt.s32.totalorder %s29, 1
        %s374 = scalar_select %p373, %s29, 1
        %p375 = scmp.lt.s32.totalorder %s372, 7
        %s376 = scalar_select %p375, %s372, 7
        %s377 = smul.addr %s374, 40
        %s378 = sadd.s32 %s376, %s377
        %s379 = smul.addr %s378, 4
        %s380 = scalar_lea.vmem %s1, %s379
        %s381 = smul.u32 8, %s30
        %s382 = smul.u32 8, %s30
        %p383 = scmp.lt.s32.totalorder %s29, 1
        %s384 = scalar_select %p383, %s29, 1
        %p385 = scmp.lt.s32.totalorder %s382, 7
        %s386 = scalar_select %p385, %s382, 7
        %s387 = smul.addr %s384, 40
        %s388 = sadd.s32 %s386, %s387
        %s389 = smul.addr %s388, 4
        %s390 = scalar_lea.vmem %s2, %s389
        %s391 = smul.u32 8, %s30
        %s392 = smul.u32 8, %s30
        %s393 = smul.u32 8, %s30
        %v395 = vld [vmem:[%s3] sm:$0x3]
        %v396 = vld [vmem:[%s370] sm:$0xff]
        %v397 = vld [vmem:[%s370 + $0x8] sm:$0xff]
        %v398 = vld [vmem:[%s370 + $0x10] sm:$0xff]
        %v399 = vld [vmem:[%s370 + $0x18] sm:$0xff]
        %v400 = vld [vmem:[%s370 + $0x20] sm:$0xff]
        %v401 = vld [vmem:[%s370 + $0x28] sm:$0xff]
        %v402 = vld [vmem:[%s370 + $0x30] sm:$0xff]
        %v403 = vld [vmem:[%s370 + $0x38] sm:$0xff]
        %v404 = vld [vmem:[%s370 + $0x40] sm:$0xff]
        %v405 = vld [vmem:[%s370 + $0x48] sm:$0xff]
        %v406 = vld [vmem:[%s370 + $0x50] sm:$0xff]
        %v407 = vld [vmem:[%s370 + $0x58] sm:$0xff]
        %v408 = vld [vmem:[%s370 + $0x60] sm:$0xff]
        %v409 = vld [vmem:[%s370 + $0x68] sm:$0xff]
        %v410 = vld [vmem:[%s370 + $0x70] sm:$0xff]
        %v411 = vld [vmem:[%s370 + $0x78] sm:$0xff]
        %v412 = vld [vmem:[%s370 + $0x80] sm:$0x33]
        %v413 = vld [vmem:[%s370 + $0x88] sm:$0x33]
        %v414 = vld [vmem:[%s370 + $0x90] sm:$0x33]
        %v415 = vld [vmem:[%s370 + $0x98] sm:$0x33]
        %v436 = vunpack.c.l.b16 %v396
        %v437 = vunpack.c.h.b16 %v396
        %v438 = vunpack.c.l.b16 %v397
        %v439 = vunpack.c.h.b16 %v397
        %v440 = vunpack.c.l.b16 %v398
        %v441 = vunpack.c.h.b16 %v398
        %v442 = vunpack.c.l.b16 %v399
        %v443 = vunpack.c.h.b16 %v399
        %v444 = vunpack.c.l.b16 %v400
        %v445 = vunpack.c.h.b16 %v400
        %v446 = vunpack.c.l.b16 %v401
        %v447 = vunpack.c.h.b16 %v401
        %v448 = vunpack.c.l.b16 %v402
        %v449 = vunpack.c.h.b16 %v402
        %v450 = vunpack.c.l.b16 %v403
        %v451 = vunpack.c.h.b16 %v403
        %v452 = vunpack.c.l.b16 %v404
        %v453 = vunpack.c.h.b16 %v404
        %v454 = vunpack.c.l.b16 %v405
        %v455 = vunpack.c.h.b16 %v405
        %v456 = vunpack.c.l.b16 %v406
        %v457 = vunpack.c.h.b16 %v406
        %v458 = vunpack.c.l.b16 %v407
        %v459 = vunpack.c.h.b16 %v407
        %v460 = vunpack.c.l.b16 %v408
        %v461 = vunpack.c.h.b16 %v408
        %v462 = vunpack.c.l.b16 %v409
        %v463 = vunpack.c.h.b16 %v409
        %v464 = vunpack.c.l.b16 %v410
        %v465 = vunpack.c.h.b16 %v410
        %v466 = vunpack.c.l.b16 %v411
        %v467 = vunpack.c.h.b16 %v411
        %v468 = vunpack.c.l.b16 %v412
        %v469 = vunpack.c.h.b16 %v412
        %v470 = vunpack.c.l.b16 %v413
        %v471 = vunpack.c.h.b16 %v413
        %v472 = vunpack.c.l.b16 %v414
        %v473 = vunpack.c.h.b16 %v414
        %v474 = vunpack.c.l.b16 %v415
        %v475 = vunpack.c.h.b16 %v415
        %v476 = vpack.c.b16 %v444, %v436
        %v477 = vpack.c.b16 %v445, %v437
        %v478 = vpack.c.b16 %v446, %v438
        %v479 = vpack.c.b16 %v447, %v439
        %v480 = vpack.c.b16 %v448, %v440
        %v481 = vpack.c.b16 %v449, %v441
        %v482 = vpack.c.b16 %v450, %v442
        %v483 = vpack.c.b16 %v451, %v443
        %v484 = vpack.c.b16 %v460, %v452
        %v485 = vpack.c.b16 %v461, %v453
        %v486 = vpack.c.b16 %v462, %v454
        %v487 = vpack.c.b16 %v463, %v455
        %v488 = vpack.c.b16 %v464, %v456
        %v489 = vpack.c.b16 %v465, %v457
        %v490 = vpack.c.b16 %v466, %v458
        %v491 = vpack.c.b16 %v467, %v459
        %v492 = vpack.c.b16 %v468, %v468
        %v493 = vpack.c.b16 %v469, %v469
        %v494 = vpack.c.b16 %v470, %v470
        %v495 = vpack.c.b16 %v471, %v471
        %v496 = vpack.c.b16 %v472, %v472
        %v497 = vpack.c.b16 %v473, %v473
        %v498 = vpack.c.b16 %v474, %v474
        %v499 = vpack.c.b16 %v475, %v475
        %vm516 = vcmask 293888
        %v518 = vsel %vm516, %v395, 0
        %vm520 = vcmask 1041408
        %v522 = vsel %vm520, %v492, 0
        %v525 = vsel %vm520, %v493, 0
        %v528 = vsel %vm520, %v494, 0
        %v531 = vsel %vm520, %v495, 0
        %v534 = vsel %vm520, %v496, 0
        %v537 = vsel %vm520, %v497, 0
        %v540 = vsel %vm520, %v498, 0
        %v543 = vsel %vm520, %v499, 0
        %545 = vmatprep.subr.bf16.mxu0 0
        %546 = vmatpush1.bf16.msra.mxu0 0
        %547 = vmatprep.subr.bf16.mxu0 0
        %548 = vmatpush1.bf16.msra.mxu0 0
        %549 = vmatprep.subr.bf16.mxu0 0
        %550 = vmatpush1.bf16.msra.mxu0 0
        %551 = vmatprep.subr.bf16.mxu0 0
        %552 = vmatpush1.bf16.msra.mxu0 0
        %553 = vmatprep.subr.bf16.mxu0 0
        %554 = vmatpush1.bf16.msra.mxu0 0
        %555 = vmatprep.subr.bf16.mxu0 %v525
        %556 = vmatpush1.bf16.msra.mxu0 %v522
        %557 = vmatprep.subr.bf16.mxu0 %v485
        %558 = vmatpush1.bf16.msra.mxu0 %v484
        %559 = vmatprep.subr.bf16.mxu0 %v477
        %560 = vmatpush1.bf16.msra.mxu0 %v476
        %561 = vmatprep.subr.bf16.mxu0 0
        %562 = vmatpush2.bf16.msra.mxu0 0
        %563 = vmatprep.subr.bf16.mxu0 0
        %564 = vmatpush2.bf16.msra.mxu0 0
        %565 = vmatprep.subr.bf16.mxu0 0
        %566 = vmatpush2.bf16.msra.mxu0 0
        %567 = vmatprep.subr.bf16.mxu0 0
        %568 = vmatpush2.bf16.msra.mxu0 0
        %569 = vmatprep.subr.bf16.mxu0 0
        %570 = vmatpush2.bf16.msra.mxu0 0
        %571 = vmatprep.subr.bf16.mxu0 0
        %572 = vmatpush2.bf16.msra.mxu0 0
        %573 = vmatprep.subr.bf16.mxu0 0
        %574 = vmatpush2.bf16.msra.mxu0 0
        %575 = vmatprep.subr.bf16.mxu0 0
        %576 = vmatpush2.bf16.msra.mxu0 0
        %577 = vmatprep.mubr.bf16.mxu0 0
        %578 = vmatmul.mubr.bf16.gmra.mxu0 %v518
        %v579 = vpop.f32.mrf.mxu0
        %v580 = vadd.f32 0.0, %v579
        %v581 = vpop.f32.mrf.mxu0
        %v582 = vadd.f32 0.0, %v581
        %v583 = vpop.f32.mrf.mxu0
        %v584 = vpop.f32.mrf.mxu0
        %585 = vdwg.mxu0
        %586 = vmatprep.subr.bf16.mxu0 0
        %587 = vmatpush1.bf16.msra.mxu0 0
        %588 = vmatprep.subr.bf16.mxu0 0
        %589 = vmatpush1.bf16.msra.mxu0 0
        %590 = vmatprep.subr.bf16.mxu0 0
        %591 = vmatpush1.bf16.msra.mxu0 0
        %592 = vmatprep.subr.bf16.mxu0 0
        %593 = vmatpush1.bf16.msra.mxu0 0
        %594 = vmatprep.subr.bf16.mxu0 0
        %595 = vmatpush1.bf16.msra.mxu0 0
        %596 = vmatprep.subr.bf16.mxu0 %v531
        %597 = vmatpush1.bf16.msra.mxu0 %v528
        %598 = vmatprep.subr.bf16.mxu0 %v487
        %599 = vmatpush1.bf16.msra.mxu0 %v486
        %600 = vmatprep.subr.bf16.mxu0 %v479
        %601 = vmatpush1.bf16.msra.mxu0 %v478
        %602 = vmatprep.subr.bf16.mxu0 0
        %603 = vmatpush2.bf16.msra.mxu0 0
        %604 = vmatprep.subr.bf16.mxu0 0
        %605 = vmatpush2.bf16.msra.mxu0 0
        %606 = vmatprep.subr.bf16.mxu0 0
        %607 = vmatpush2.bf16.msra.mxu0 0
        %608 = vmatprep.subr.bf16.mxu0 0
        %609 = vmatpush2.bf16.msra.mxu0 0
        %610 = vmatprep.subr.bf16.mxu0 0
        %611 = vmatpush2.bf16.msra.mxu0 0
        %612 = vmatprep.subr.bf16.mxu0 0
        %613 = vmatpush2.bf16.msra.mxu0 0
        %614 = vmatprep.subr.bf16.mxu0 0
        %615 = vmatpush2.bf16.msra.mxu0 0
        %616 = vmatprep.subr.bf16.mxu0 0
        %617 = vmatpush2.bf16.msra.mxu0 0
        %618 = vmatprep.mubr.bf16.mxu0 0
        %619 = vmatmul.mubr.bf16.gmra.mxu0 %v518
        %v620 = vpop.f32.mrf.mxu0
        %v621 = vadd.f32 0.0, %v620
        %v622 = vpop.f32.mrf.mxu0
        %v623 = vadd.f32 0.0, %v622
        %v624 = vpop.f32.mrf.mxu0
        %v625 = vpop.f32.mrf.mxu0
        %626 = vdwg.mxu0
        %627 = vmatprep.subr.bf16.mxu0 0
        %628 = vmatpush1.bf16.msra.mxu0 0
        %629 = vmatprep.subr.bf16.mxu0 0
        %630 = vmatpush1.bf16.msra.mxu0 0
        %631 = vmatprep.subr.bf16.mxu0 0
        %632 = vmatpush1.bf16.msra.mxu0 0
        %633 = vmatprep.subr.bf16.mxu0 0
        %634 = vmatpush1.bf16.msra.mxu0 0
        %635 = vmatprep.subr.bf16.mxu0 0
        %636 = vmatpush1.bf16.msra.mxu0 0
        %637 = vmatprep.subr.bf16.mxu0 %v537
        %638 = vmatpush1.bf16.msra.mxu0 %v534
        %639 = vmatprep.subr.bf16.mxu0 %v489
        %640 = vmatpush1.bf16.msra.mxu0 %v488
        %641 = vmatprep.subr.bf16.mxu0 %v481
        %642 = vmatpush1.bf16.msra.mxu0 %v480
        %643 = vmatprep.subr.bf16.mxu0 0
        %644 = vmatpush2.bf16.msra.mxu0 0
        %645 = vmatprep.subr.bf16.mxu0 0
        %646 = vmatpush2.bf16.msra.mxu0 0
        %647 = vmatprep.subr.bf16.mxu0 0
        %648 = vmatpush2.bf16.msra.mxu0 0
        %649 = vmatprep.subr.bf16.mxu0 0
        %650 = vmatpush2.bf16.msra.mxu0 0
        %651 = vmatprep.subr.bf16.mxu0 0
        %652 = vmatpush2.bf16.msra.mxu0 0
        %653 = vmatprep.subr.bf16.mxu0 0
        %654 = vmatpush2.bf16.msra.mxu0 0
        %655 = vmatprep.subr.bf16.mxu0 0
        %656 = vmatpush2.bf16.msra.mxu0 0
        %657 = vmatprep.subr.bf16.mxu0 0
        %658 = vmatpush2.bf16.msra.mxu0 0
        %659 = vmatprep.mubr.bf16.mxu0 0
        %660 = vmatmul.mubr.bf16.gmra.mxu0 %v518
        %v661 = vpop.f32.mrf.mxu0
        %v662 = vadd.f32 0.0, %v661
        %v663 = vpop.f32.mrf.mxu0
        %v664 = vadd.f32 0.0, %v663
        %v665 = vpop.f32.mrf.mxu0
        %v666 = vpop.f32.mrf.mxu0
        %667 = vdwg.mxu0
        %668 = vmatprep.subr.bf16.mxu0 0
        %669 = vmatpush1.bf16.msra.mxu0 0
        %670 = vmatprep.subr.bf16.mxu0 0
        %671 = vmatpush1.bf16.msra.mxu0 0
        %672 = vmatprep.subr.bf16.mxu0 0
        %673 = vmatpush1.bf16.msra.mxu0 0
        %674 = vmatprep.subr.bf16.mxu0 0
        %675 = vmatpush1.bf16.msra.mxu0 0
        %676 = vmatprep.subr.bf16.mxu0 0
        %677 = vmatpush1.bf16.msra.mxu0 0
        %678 = vmatprep.subr.bf16.mxu0 %v543
        %679 = vmatpush1.bf16.msra.mxu0 %v540
        %680 = vmatprep.subr.bf16.mxu0 %v491
        %681 = vmatpush1.bf16.msra.mxu0 %v490
        %682 = vmatprep.subr.bf16.mxu0 %v483
        %683 = vmatpush1.bf16.msra.mxu0 %v482
        %684 = vmatprep.subr.bf16.mxu0 0
        %685 = vmatpush2.bf16.msra.mxu0 0
        %686 = vmatprep.subr.bf16.mxu0 0
        %687 = vmatpush2.bf16.msra.mxu0 0
        %688 = vmatprep.subr.bf16.mxu0 0
        %689 = vmatpush2.bf16.msra.mxu0 0
        %690 = vmatprep.subr.bf16.mxu0 0
        %691 = vmatpush2.bf16.msra.mxu0 0
        %692 = vmatprep.subr.bf16.mxu0 0
        %693 = vmatpush2.bf16.msra.mxu0 0
        %694 = vmatprep.subr.bf16.mxu0 0
        %695 = vmatpush2.bf16.msra.mxu0 0
        %696 = vmatprep.subr.bf16.mxu0 0
        %697 = vmatpush2.bf16.msra.mxu0 0
        %698 = vmatprep.subr.bf16.mxu0 0
        %699 = vmatpush2.bf16.msra.mxu0 0
        %700 = vmatprep.mubr.bf16.mxu0 0
        %701 = vmatmul.mubr.bf16.gmra.mxu0 %v518
        %v702 = vpop.f32.mrf.mxu0
        %v703 = vadd.f32 0.0, %v702
        %v704 = vpop.f32.mrf.mxu0
        %v705 = vadd.f32 0.0, %v704
        %v706 = vpop.f32.mrf.mxu0
        %v707 = vpop.f32.mrf.mxu0
        %708 = vdwg.mxu0
        %v709 = vld [vmem:[%s380] sm:$0xff]
        %v710 = vld [vmem:[%s380 + $0x8] sm:$0xff]
        %v711 = vld [vmem:[%s380 + $0x10] sm:$0xff]
        %v712 = vld [vmem:[%s380 + $0x18] sm:$0xff]
        %v713 = vld [vmem:[%s380 + $0x20] sm:$0xff]
        %v714 = vld [vmem:[%s380 + $0x28] sm:$0xff]
        %v715 = vld [vmem:[%s380 + $0x30] sm:$0xff]
        %v716 = vld [vmem:[%s380 + $0x38] sm:$0xff]
        %v717 = vld [vmem:[%s380 + $0x40] sm:$0xff]
        %v718 = vld [vmem:[%s380 + $0x48] sm:$0xff]
        %v719 = vld [vmem:[%s380 + $0x50] sm:$0xff]
        %v720 = vld [vmem:[%s380 + $0x58] sm:$0xff]
        %v721 = vld [vmem:[%s380 + $0x60] sm:$0xff]
        %v722 = vld [vmem:[%s380 + $0x68] sm:$0xff]
        %v723 = vld [vmem:[%s380 + $0x70] sm:$0xff]
        %v724 = vld [vmem:[%s380 + $0x78] sm:$0xff]
        %v725 = vld [vmem:[%s380 + $0x80] sm:$0x33]
        %v726 = vld [vmem:[%s380 + $0x88] sm:$0x33]
        %v727 = vld [vmem:[%s380 + $0x90] sm:$0x33]
        %v728 = vld [vmem:[%s380 + $0x98] sm:$0x33]
        %v749 = vunpack.c.l.b16 %v709
        %v750 = vunpack.c.h.b16 %v709
        %v751 = vunpack.c.l.b16 %v710
        %v752 = vunpack.c.h.b16 %v710
        %v753 = vunpack.c.l.b16 %v711
        %v754 = vunpack.c.h.b16 %v711
        %v755 = vunpack.c.l.b16 %v712
        %v756 = vunpack.c.h.b16 %v712
        %v757 = vunpack.c.l.b16 %v713
        %v758 = vunpack.c.h.b16 %v713
        %v759 = vunpack.c.l.b16 %v714
        %v760 = vunpack.c.h.b16 %v714
        %v761 = vunpack.c.l.b16 %v715
        %v762 = vunpack.c.h.b16 %v715
        %v763 = vunpack.c.l.b16 %v716
        %v764 = vunpack.c.h.b16 %v716
        %v765 = vunpack.c.l.b16 %v717
        %v766 = vunpack.c.h.b16 %v717
        %v767 = vunpack.c.l.b16 %v718
        %v768 = vunpack.c.h.b16 %v718
        %v769 = vunpack.c.l.b16 %v719
        %v770 = vunpack.c.h.b16 %v719
        %v771 = vunpack.c.l.b16 %v720
        %v772 = vunpack.c.h.b16 %v720
        %v773 = vunpack.c.l.b16 %v721
        %v774 = vunpack.c.h.b16 %v721
        %v775 = vunpack.c.l.b16 %v722
        %v776 = vunpack.c.h.b16 %v722
        %v777 = vunpack.c.l.b16 %v723
        %v778 = vunpack.c.h.b16 %v723
        %v779 = vunpack.c.l.b16 %v724
        %v780 = vunpack.c.h.b16 %v724
        %v781 = vunpack.c.l.b16 %v725
        %v782 = vunpack.c.h.b16 %v725
        %v783 = vunpack.c.l.b16 %v726
        %v784 = vunpack.c.h.b16 %v726
        %v785 = vunpack.c.l.b16 %v727
        %v786 = vunpack.c.h.b16 %v727
        %v787 = vunpack.c.l.b16 %v728
        %v788 = vunpack.c.h.b16 %v728
        %v789 = vpack.c.b16 %v757, %v749
        %v790 = vpack.c.b16 %v758, %v750
        %v791 = vpack.c.b16 %v759, %v751
        %v792 = vpack.c.b16 %v760, %v752
        %v793 = vpack.c.b16 %v761, %v753
        %v794 = vpack.c.b16 %v762, %v754
        %v795 = vpack.c.b16 %v763, %v755
        %v796 = vpack.c.b16 %v764, %v756
        %v797 = vpack.c.b16 %v773, %v765
        %v798 = vpack.c.b16 %v774, %v766
        %v799 = vpack.c.b16 %v775, %v767
        %v800 = vpack.c.b16 %v776, %v768
        %v801 = vpack.c.b16 %v777, %v769
        %v802 = vpack.c.b16 %v778, %v770
        %v803 = vpack.c.b16 %v779, %v771
        %v804 = vpack.c.b16 %v780, %v772
        %v805 = vpack.c.b16 %v781, %v781
        %v806 = vpack.c.b16 %v782, %v782
        %v807 = vpack.c.b16 %v783, %v783
        %v808 = vpack.c.b16 %v784, %v784
        %v809 = vpack.c.b16 %v785, %v785
        %v810 = vpack.c.b16 %v786, %v786
        %v811 = vpack.c.b16 %v787, %v787
        %v812 = vpack.c.b16 %v788, %v788
        %v830 = vsel %vm520, %v805, 0
        %v833 = vsel %vm520, %v806, 0
        %v836 = vsel %vm520, %v807, 0
        %v839 = vsel %vm520, %v808, 0
        %v842 = vsel %vm520, %v809, 0
        %v845 = vsel %vm520, %v810, 0
        %v848 = vsel %vm520, %v811, 0
        %v851 = vsel %vm520, %v812, 0
        %853 = vmatprep.subr.bf16.mxu0 0
        %854 = vmatpush1.bf16.msra.mxu0 0
        %855 = vmatprep.subr.bf16.mxu0 0
        %856 = vmatpush1.bf16.msra.mxu0 0
        %857 = vmatprep.subr.bf16.mxu0 0
        %858 = vmatpush1.bf16.msra.mxu0 0
        %859 = vmatprep.subr.bf16.mxu0 0
        %860 = vmatpush1.bf16.msra.mxu0 0
        %861 = vmatprep.subr.bf16.mxu0 0
        %862 = vmatpush1.bf16.msra.mxu0 0
        %863 = vmatprep.subr.bf16.mxu0 %v833
        %864 = vmatpush1.bf16.msra.mxu0 %v830
        %865 = vmatprep.subr.bf16.mxu0 %v798
        %866 = vmatpush1.bf16.msra.mxu0 %v797
        %867 = vmatprep.subr.bf16.mxu0 %v790
        %868 = vmatpush1.bf16.msra.mxu0 %v789
        %869 = vmatprep.subr.bf16.mxu0 0
        %870 = vmatpush2.bf16.msra.mxu0 0
        %871 = vmatprep.subr.bf16.mxu0 0
        %872 = vmatpush2.bf16.msra.mxu0 0
        %873 = vmatprep.subr.bf16.mxu0 0
        %874 = vmatpush2.bf16.msra.mxu0 0
        %875 = vmatprep.subr.bf16.mxu0 0
        %876 = vmatpush2.bf16.msra.mxu0 0
        %877 = vmatprep.subr.bf16.mxu0 0
        %878 = vmatpush2.bf16.msra.mxu0 0
        %879 = vmatprep.subr.bf16.mxu0 0
        %880 = vmatpush2.bf16.msra.mxu0 0
        %881 = vmatprep.subr.bf16.mxu0 0
        %882 = vmatpush2.bf16.msra.mxu0 0
        %883 = vmatprep.subr.bf16.mxu0 0
        %884 = vmatpush2.bf16.msra.mxu0 0
        %885 = vmatprep.mubr.bf16.mxu0 0
        %886 = vmatmul.mubr.bf16.gmra.mxu0 %v518
        %v887 = vpop.f32.mrf.mxu0
        %v888 = vadd.f32 0.0, %v887
        %v889 = vpop.f32.mrf.mxu0
        %v890 = vadd.f32 0.0, %v889
        %v891 = vpop.f32.mrf.mxu0
        %v892 = vpop.f32.mrf.mxu0
        %893 = vdwg.mxu0
        %894 = vmatprep.subr.bf16.mxu0 0
        %895 = vmatpush1.bf16.msra.mxu0 0
        %896 = vmatprep.subr.bf16.mxu0 0
        %897 = vmatpush1.bf16.msra.mxu0 0
        %898 = vmatprep.subr.bf16.mxu0 0
        %899 = vmatpush1.bf16.msra.mxu0 0
        %900 = vmatprep.subr.bf16.mxu0 0
        %901 = vmatpush1.bf16.msra.mxu0 0
        %902 = vmatprep.subr.bf16.mxu0 0
        %903 = vmatpush1.bf16.msra.mxu0 0
        %904 = vmatprep.subr.bf16.mxu0 %v839
        %905 = vmatpush1.bf16.msra.mxu0 %v836
        %906 = vmatprep.subr.bf16.mxu0 %v800
        %907 = vmatpush1.bf16.msra.mxu0 %v799
        %908 = vmatprep.subr.bf16.mxu0 %v792
        %909 = vmatpush1.bf16.msra.mxu0 %v791
        %910 = vmatprep.subr.bf16.mxu0 0
        %911 = vmatpush2.bf16.msra.mxu0 0
        %912 = vmatprep.subr.bf16.mxu0 0
        %913 = vmatpush2.bf16.msra.mxu0 0
        %914 = vmatprep.subr.bf16.mxu0 0
        %915 = vmatpush2.bf16.msra.mxu0 0
        %916 = vmatprep.subr.bf16.mxu0 0
        %917 = vmatpush2.bf16.msra.mxu0 0
        %918 = vmatprep.subr.bf16.mxu0 0
        %919 = vmatpush2.bf16.msra.mxu0 0
        %920 = vmatprep.subr.bf16.mxu0 0
        %921 = vmatpush2.bf16.msra.mxu0 0
        %922 = vmatprep.subr.bf16.mxu0 0
        %923 = vmatpush2.bf16.msra.mxu0 0
        %924 = vmatprep.subr.bf16.mxu0 0
        %925 = vmatpush2.bf16.msra.mxu0 0
        %926 = vmatprep.mubr.bf16.mxu0 0
        %927 = vmatmul.mubr.bf16.gmra.mxu0 %v518
        %v928 = vpop.f32.mrf.mxu0
        %v929 = vadd.f32 0.0, %v928
        %v930 = vpop.f32.mrf.mxu0
        %v931 = vadd.f32 0.0, %v930
        %v932 = vpop.f32.mrf.mxu0
        %v933 = vpop.f32.mrf.mxu0
        %934 = vdwg.mxu0
        %935 = vmatprep.subr.bf16.mxu0 0
        %936 = vmatpush1.bf16.msra.mxu0 0
        %937 = vmatprep.subr.bf16.mxu0 0
        %938 = vmatpush1.bf16.msra.mxu0 0
        %939 = vmatprep.subr.bf16.mxu0 0
        %940 = vmatpush1.bf16.msra.mxu0 0
        %941 = vmatprep.subr.bf16.mxu0 0
        %942 = vmatpush1.bf16.msra.mxu0 0
        %943 = vmatprep.subr.bf16.mxu0 0
        %944 = vmatpush1.bf16.msra.mxu0 0
        %945 = vmatprep.subr.bf16.mxu0 %v845
        %946 = vmatpush1.bf16.msra.mxu0 %v842
        %947 = vmatprep.subr.bf16.mxu0 %v802
        %948 = vmatpush1.bf16.msra.mxu0 %v801
        %949 = vmatprep.subr.bf16.mxu0 %v794
        %950 = vmatpush1.bf16.msra.mxu0 %v793
        %951 = vmatprep.subr.bf16.mxu0 0
        %952 = vmatpush2.bf16.msra.mxu0 0
        %953 = vmatprep.subr.bf16.mxu0 0
        %954 = vmatpush2.bf16.msra.mxu0 0
        %955 = vmatprep.subr.bf16.mxu0 0
        %956 = vmatpush2.bf16.msra.mxu0 0
        %957 = vmatprep.subr.bf16.mxu0 0
        %958 = vmatpush2.bf16.msra.mxu0 0
        %959 = vmatprep.subr.bf16.mxu0 0
        %960 = vmatpush2.bf16.msra.mxu0 0
        %961 = vmatprep.subr.bf16.mxu0 0
        %962 = vmatpush2.bf16.msra.mxu0 0
        %963 = vmatprep.subr.bf16.mxu0 0
        %964 = vmatpush2.bf16.msra.mxu0 0
        %965 = vmatprep.subr.bf16.mxu0 0
        %966 = vmatpush2.bf16.msra.mxu0 0
        %967 = vmatprep.mubr.bf16.mxu0 0
        %968 = vmatmul.mubr.bf16.gmra.mxu0 %v518
        %v969 = vpop.f32.mrf.mxu0
        %v970 = vadd.f32 0.0, %v969
        %v971 = vpop.f32.mrf.mxu0
        %v972 = vadd.f32 0.0, %v971
        %v973 = vpop.f32.mrf.mxu0
        %v974 = vpop.f32.mrf.mxu0
        %975 = vdwg.mxu0
        %976 = vmatprep.subr.bf16.mxu0 0
        %977 = vmatpush1.bf16.msra.mxu0 0
        %978 = vmatprep.subr.bf16.mxu0 0
        %979 = vmatpush1.bf16.msra.mxu0 0
        %980 = vmatprep.subr.bf16.mxu0 0
        %981 = vmatpush1.bf16.msra.mxu0 0
        %982 = vmatprep.subr.bf16.mxu0 0
        %983 = vmatpush1.bf16.msra.mxu0 0
        %984 = vmatprep.subr.bf16.mxu0 0
        %985 = vmatpush1.bf16.msra.mxu0 0
        %986 = vmatprep.subr.bf16.mxu0 %v851
        %987 = vmatpush1.bf16.msra.mxu0 %v848
        %988 = vmatprep.subr.bf16.mxu0 %v804
        %989 = vmatpush1.bf16.msra.mxu0 %v803
        %990 = vmatprep.subr.bf16.mxu0 %v796
        %991 = vmatpush1.bf16.msra.mxu0 %v795
        %992 = vmatprep.subr.bf16.mxu0 0
        %993 = vmatpush2.bf16.msra.mxu0 0
        %994 = vmatprep.subr.bf16.mxu0 0
        %995 = vmatpush2.bf16.msra.mxu0 0
        %996 = vmatprep.subr.bf16.mxu0 0
        %997 = vmatpush2.bf16.msra.mxu0 0
        %998 = vmatprep.subr.bf16.mxu0 0
        %999 = vmatpush2.bf16.msra.mxu0 0
        %1000 = vmatprep.subr.bf16.mxu0 0
        %1001 = vmatpush2.bf16.msra.mxu0 0
        %1002 = vmatprep.subr.bf16.mxu0 0
        %1003 = vmatpush2.bf16.msra.mxu0 0
        %1004 = vmatprep.subr.bf16.mxu0 0
        %1005 = vmatpush2.bf16.msra.mxu0 0
        %1006 = vmatprep.subr.bf16.mxu0 0
        %1007 = vmatpush2.bf16.msra.mxu0 0
        %1008 = vmatprep.mubr.bf16.mxu0 0
        %1009 = vmatmul.mubr.bf16.gmra.mxu0 %v518
        %v1010 = vpop.f32.mrf.mxu0
        %v1011 = vadd.f32 0.0, %v1010
        %v1012 = vpop.f32.mrf.mxu0
        %v1013 = vadd.f32 0.0, %v1012
        %v1014 = vpop.f32.mrf.mxu0
        %v1015 = vpop.f32.mrf.mxu0
        %1016 = vdwg.mxu0
        %v1017 = vld [vmem:[%s390] sm:$0xff]
        %v1018 = vld [vmem:[%s390 + $0x8] sm:$0xff]
        %v1019 = vld [vmem:[%s390 + $0x10] sm:$0xff]
        %v1020 = vld [vmem:[%s390 + $0x18] sm:$0xff]
        %v1021 = vld [vmem:[%s390 + $0x20] sm:$0xff]
        %v1022 = vld [vmem:[%s390 + $0x28] sm:$0xff]
        %v1023 = vld [vmem:[%s390 + $0x30] sm:$0xff]
        %v1024 = vld [vmem:[%s390 + $0x38] sm:$0xff]
        %v1025 = vld [vmem:[%s390 + $0x40] sm:$0xff]
        %v1026 = vld [vmem:[%s390 + $0x48] sm:$0xff]
        %v1027 = vld [vmem:[%s390 + $0x50] sm:$0xff]
        %v1028 = vld [vmem:[%s390 + $0x58] sm:$0xff]
        %v1029 = vld [vmem:[%s390 + $0x60] sm:$0xff]
        %v1030 = vld [vmem:[%s390 + $0x68] sm:$0xff]
        %v1031 = vld [vmem:[%s390 + $0x70] sm:$0xff]
        %v1032 = vld [vmem:[%s390 + $0x78] sm:$0xff]
        %v1033 = vld [vmem:[%s390 + $0x80] sm:$0x33]
        %v1034 = vld [vmem:[%s390 + $0x88] sm:$0x33]
        %v1035 = vld [vmem:[%s390 + $0x90] sm:$0x33]
        %v1036 = vld [vmem:[%s390 + $0x98] sm:$0x33]
        %v1057 = vunpack.c.l.b16 %v1017
        %v1058 = vunpack.c.h.b16 %v1017
        %v1059 = vunpack.c.l.b16 %v1018
        %v1060 = vunpack.c.h.b16 %v1018
        %v1061 = vunpack.c.l.b16 %v1019
        %v1062 = vunpack.c.h.b16 %v1019
        %v1063 = vunpack.c.l.b16 %v1020
        %v1064 = vunpack.c.h.b16 %v1020
        %v1065 = vunpack.c.l.b16 %v1021
        %v1066 = vunpack.c.h.b16 %v1021
        %v1067 = vunpack.c.l.b16 %v1022
        %v1068 = vunpack.c.h.b16 %v1022
        %v1069 = vunpack.c.l.b16 %v1023
        %v1070 = vunpack.c.h.b16 %v1023
        %v1071 = vunpack.c.l.b16 %v1024
        %v1072 = vunpack.c.h.b16 %v1024
        %v1073 = vunpack.c.l.b16 %v1025
        %v1074 = vunpack.c.h.b16 %v1025
        %v1075 = vunpack.c.l.b16 %v1026
        %v1076 = vunpack.c.h.b16 %v1026
        %v1077 = vunpack.c.l.b16 %v1027
        %v1078 = vunpack.c.h.b16 %v1027
        %v1079 = vunpack.c.l.b16 %v1028
        %v1080 = vunpack.c.h.b16 %v1028
        %v1081 = vunpack.c.l.b16 %v1029
        %v1082 = vunpack.c.h.b16 %v1029
        %v1083 = vunpack.c.l.b16 %v1030
        %v1084 = vunpack.c.h.b16 %v1030
        %v1085 = vunpack.c.l.b16 %v1031
        %v1086 = vunpack.c.h.b16 %v1031
        %v1087 = vunpack.c.l.b16 %v1032
        %v1088 = vunpack.c.h.b16 %v1032
        %v1089 = vunpack.c.l.b16 %v1033
        %v1090 = vunpack.c.h.b16 %v1033
        %v1091 = vunpack.c.l.b16 %v1034
        %v1092 = vunpack.c.h.b16 %v1034
        %v1093 = vunpack.c.l.b16 %v1035
        %v1094 = vunpack.c.h.b16 %v1035
        %v1095 = vunpack.c.l.b16 %v1036
        %v1096 = vunpack.c.h.b16 %v1036
        %v1097 = vpack.c.b16 %v1065, %v1057
        %v1098 = vpack.c.b16 %v1066, %v1058
        %v1099 = vpack.c.b16 %v1067, %v1059
        %v1100 = vpack.c.b16 %v1068, %v1060
        %v1101 = vpack.c.b16 %v1069, %v1061
        %v1102 = vpack.c.b16 %v1070, %v1062
        %v1103 = vpack.c.b16 %v1071, %v1063
        %v1104 = vpack.c.b16 %v1072, %v1064
        %v1105 = vpack.c.b16 %v1081, %v1073
        %v1106 = vpack.c.b16 %v1082, %v1074
        %v1107 = vpack.c.b16 %v1083, %v1075
        %v1108 = vpack.c.b16 %v1084, %v1076
        %v1109 = vpack.c.b16 %v1085, %v1077
        %v1110 = vpack.c.b16 %v1086, %v1078
        %v1111 = vpack.c.b16 %v1087, %v1079
        %v1112 = vpack.c.b16 %v1088, %v1080
        %v1113 = vpack.c.b16 %v1089, %v1089
        %v1114 = vpack.c.b16 %v1090, %v1090
        %v1115 = vpack.c.b16 %v1091, %v1091
        %v1116 = vpack.c.b16 %v1092, %v1092
        %v1117 = vpack.c.b16 %v1093, %v1093
        %v1118 = vpack.c.b16 %v1094, %v1094
        %v1119 = vpack.c.b16 %v1095, %v1095
        %v1120 = vpack.c.b16 %v1096, %v1096
        %v1138 = vsel %vm520, %v1113, 0
        %v1141 = vsel %vm520, %v1114, 0
        %v1144 = vsel %vm520, %v1115, 0
        %v1147 = vsel %vm520, %v1116, 0
        %v1150 = vsel %vm520, %v1117, 0
        %v1153 = vsel %vm520, %v1118, 0
        %v1156 = vsel %vm520, %v1119, 0
        %v1159 = vsel %vm520, %v1120, 0
        %1161 = vmatprep.subr.bf16.mxu0 0
        %1162 = vmatpush1.bf16.msra.mxu0 0
        %1163 = vmatprep.subr.bf16.mxu0 0
        %1164 = vmatpush1.bf16.msra.mxu0 0
        %1165 = vmatprep.subr.bf16.mxu0 0
        %1166 = vmatpush1.bf16.msra.mxu0 0
        %1167 = vmatprep.subr.bf16.mxu0 0
        %1168 = vmatpush1.bf16.msra.mxu0 0
        %1169 = vmatprep.subr.bf16.mxu0 0
        %1170 = vmatpush1.bf16.msra.mxu0 0
        %1171 = vmatprep.subr.bf16.mxu0 %v1141
        %1172 = vmatpush1.bf16.msra.mxu0 %v1138
        %1173 = vmatprep.subr.bf16.mxu0 %v1106
        %1174 = vmatpush1.bf16.msra.mxu0 %v1105
        %1175 = vmatprep.subr.bf16.mxu0 %v1098
        %1176 = vmatpush1.bf16.msra.mxu0 %v1097
        %1177 = vmatprep.subr.bf16.mxu0 0
        %1178 = vmatpush2.bf16.msra.mxu0 0
        %1179 = vmatprep.subr.bf16.mxu0 0
        %1180 = vmatpush2.bf16.msra.mxu0 0
        %1181 = vmatprep.subr.bf16.mxu0 0
        %1182 = vmatpush2.bf16.msra.mxu0 0
        %1183 = vmatprep.subr.bf16.mxu0 0
        %1184 = vmatpush2.bf16.msra.mxu0 0
        %1185 = vmatprep.subr.bf16.mxu0 0
        %1186 = vmatpush2.bf16.msra.mxu0 0
        %1187 = vmatprep.subr.bf16.mxu0 0
        %1188 = vmatpush2.bf16.msra.mxu0 0
        %1189 = vmatprep.subr.bf16.mxu0 0
        %1190 = vmatpush2.bf16.msra.mxu0 0
        %1191 = vmatprep.subr.bf16.mxu0 0
        %1192 = vmatpush2.bf16.msra.mxu0 0
        %1193 = vmatprep.mubr.bf16.mxu0 0
        %1194 = vmatmul.mubr.bf16.gmra.mxu0 %v518
        %v1195 = vpop.f32.mrf.mxu0
        %v1196 = vadd.f32 0.0, %v1195
        %v1197 = vpop.f32.mrf.mxu0
        %v1198 = vadd.f32 0.0, %v1197
        %v1199 = vpop.f32.mrf.mxu0
        %v1200 = vpop.f32.mrf.mxu0
        %1201 = vdwg.mxu0
        %1202 = vmatprep.subr.bf16.mxu0 0
        %1203 = vmatpush1.bf16.msra.mxu0 0
        %1204 = vmatprep.subr.bf16.mxu0 0
        %1205 = vmatpush1.bf16.msra.mxu0 0
        %1206 = vmatprep.subr.bf16.mxu0 0
        %1207 = vmatpush1.bf16.msra.mxu0 0
        %1208 = vmatprep.subr.bf16.mxu0 0
        %1209 = vmatpush1.bf16.msra.mxu0 0
        %1210 = vmatprep.subr.bf16.mxu0 0
        %1211 = vmatpush1.bf16.msra.mxu0 0
        %1212 = vmatprep.subr.bf16.mxu0 %v1147
        %1213 = vmatpush1.bf16.msra.mxu0 %v1144
        %1214 = vmatprep.subr.bf16.mxu0 %v1108
        %1215 = vmatpush1.bf16.msra.mxu0 %v1107
        %1216 = vmatprep.subr.bf16.mxu0 %v1100
        %1217 = vmatpush1.bf16.msra.mxu0 %v1099
        %1218 = vmatprep.subr.bf16.mxu0 0
        %1219 = vmatpush2.bf16.msra.mxu0 0
        %1220 = vmatprep.subr.bf16.mxu0 0
        %1221 = vmatpush2.bf16.msra.mxu0 0
        %1222 = vmatprep.subr.bf16.mxu0 0
        %1223 = vmatpush2.bf16.msra.mxu0 0
        %1224 = vmatprep.subr.bf16.mxu0 0
        %1225 = vmatpush2.bf16.msra.mxu0 0
        %1226 = vmatprep.subr.bf16.mxu0 0
        %1227 = vmatpush2.bf16.msra.mxu0 0
        %1228 = vmatprep.subr.bf16.mxu0 0
        %1229 = vmatpush2.bf16.msra.mxu0 0
        %1230 = vmatprep.subr.bf16.mxu0 0
        %1231 = vmatpush2.bf16.msra.mxu0 0
        %1232 = vmatprep.subr.bf16.mxu0 0
        %1233 = vmatpush2.bf16.msra.mxu0 0
        %1234 = vmatprep.mubr.bf16.mxu0 0
        %1235 = vmatmul.mubr.bf16.gmra.mxu0 %v518
        %v1236 = vpop.f32.mrf.mxu0
        %v1237 = vadd.f32 0.0, %v1236
        %v1238 = vpop.f32.mrf.mxu0
        %v1239 = vadd.f32 0.0, %v1238
        %v1240 = vpop.f32.mrf.mxu0
        %v1241 = vpop.f32.mrf.mxu0
        %1242 = vdwg.mxu0
        %1243 = vmatprep.subr.bf16.mxu0 0
        %1244 = vmatpush1.bf16.msra.mxu0 0
        %1245 = vmatprep.subr.bf16.mxu0 0
        %1246 = vmatpush1.bf16.msra.mxu0 0
        %1247 = vmatprep.subr.bf16.mxu0 0
        %1248 = vmatpush1.bf16.msra.mxu0 0
        %1249 = vmatprep.subr.bf16.mxu0 0
        %1250 = vmatpush1.bf16.msra.mxu0 0
        %1251 = vmatprep.subr.bf16.mxu0 0
        %1252 = vmatpush1.bf16.msra.mxu0 0
        %1253 = vmatprep.subr.bf16.mxu0 %v1153
        %1254 = vmatpush1.bf16.msra.mxu0 %v1150
        %1255 = vmatprep.subr.bf16.mxu0 %v1110
        %1256 = vmatpush1.bf16.msra.mxu0 %v1109
        %1257 = vmatprep.subr.bf16.mxu0 %v1102
        %1258 = vmatpush1.bf16.msra.mxu0 %v1101
        %1259 = vmatprep.subr.bf16.mxu0 0
        %1260 = vmatpush2.bf16.msra.mxu0 0
        %1261 = vmatprep.subr.bf16.mxu0 0
        %1262 = vmatpush2.bf16.msra.mxu0 0
        %1263 = vmatprep.subr.bf16.mxu0 0
        %1264 = vmatpush2.bf16.msra.mxu0 0
        %1265 = vmatprep.subr.bf16.mxu0 0
        %1266 = vmatpush2.bf16.msra.mxu0 0
        %1267 = vmatprep.subr.bf16.mxu0 0
        %1268 = vmatpush2.bf16.msra.mxu0 0
        %1269 = vmatprep.subr.bf16.mxu0 0
        %1270 = vmatpush2.bf16.msra.mxu0 0
        %1271 = vmatprep.subr.bf16.mxu0 0
        %1272 = vmatpush2.bf16.msra.mxu0 0
        %1273 = vmatprep.subr.bf16.mxu0 0
        %1274 = vmatpush2.bf16.msra.mxu0 0
        %1275 = vmatprep.mubr.bf16.mxu0 0
        %1276 = vmatmul.mubr.bf16.gmra.mxu0 %v518
        %v1277 = vpop.f32.mrf.mxu0
        %v1278 = vadd.f32 0.0, %v1277
        %v1279 = vpop.f32.mrf.mxu0
        %v1280 = vadd.f32 0.0, %v1279
        %v1281 = vpop.f32.mrf.mxu0
        %v1282 = vpop.f32.mrf.mxu0
        %1283 = vdwg.mxu0
        %1284 = vmatprep.subr.bf16.mxu0 0
        %1285 = vmatpush1.bf16.msra.mxu0 0
        %1286 = vmatprep.subr.bf16.mxu0 0
        %1287 = vmatpush1.bf16.msra.mxu0 0
        %1288 = vmatprep.subr.bf16.mxu0 0
        %1289 = vmatpush1.bf16.msra.mxu0 0
        %1290 = vmatprep.subr.bf16.mxu0 0
        %1291 = vmatpush1.bf16.msra.mxu0 0
        %1292 = vmatprep.subr.bf16.mxu0 0
        %1293 = vmatpush1.bf16.msra.mxu0 0
        %1294 = vmatprep.subr.bf16.mxu0 %v1159
        %1295 = vmatpush1.bf16.msra.mxu0 %v1156
        %1296 = vmatprep.subr.bf16.mxu0 %v1112
        %1297 = vmatpush1.bf16.msra.mxu0 %v1111
        %1298 = vmatprep.subr.bf16.mxu0 %v1104
        %1299 = vmatpush1.bf16.msra.mxu0 %v1103
        %1300 = vmatprep.subr.bf16.mxu0 0
        %1301 = vmatpush2.bf16.msra.mxu0 0
        %1302 = vmatprep.subr.bf16.mxu0 0
        %1303 = vmatpush2.bf16.msra.mxu0 0
        %1304 = vmatprep.subr.bf16.mxu0 0
        %1305 = vmatpush2.bf16.msra.mxu0 0
        %1306 = vmatprep.subr.bf16.mxu0 0
        %1307 = vmatpush2.bf16.msra.mxu0 0
        %1308 = vmatprep.subr.bf16.mxu0 0
        %1309 = vmatpush2.bf16.msra.mxu0 0
        %1310 = vmatprep.subr.bf16.mxu0 0
        %1311 = vmatpush2.bf16.msra.mxu0 0
        %1312 = vmatprep.subr.bf16.mxu0 0
        %1313 = vmatpush2.bf16.msra.mxu0 0
        %1314 = vmatprep.subr.bf16.mxu0 0
        %1315 = vmatpush2.bf16.msra.mxu0 0
        %1316 = vmatprep.mubr.bf16.mxu0 0
        %1317 = vmatmul.mubr.bf16.gmra.mxu0 %v518
        %v1318 = vpop.f32.mrf.mxu0
        %v1319 = vadd.f32 0.0, %v1318
        %v1320 = vpop.f32.mrf.mxu0
        %v1321 = vadd.f32 0.0, %v1320
        %v1322 = vpop.f32.mrf.mxu0
        %v1323 = vpop.f32.mrf.mxu0
        %1324 = vdwg.mxu0
        %v1325 = vld [vmem:[%s4] sm:$0xf]
        %v1326 = vld [vmem:[%s5] sm:$0xf]
        %v1327 = vmul.f32 %v580, %v580
        %v1328 = vmul.f32 %v582, %v582
        %v1329 = vmul.f32 %v621, %v621
        %v1330 = vmul.f32 %v623, %v623
        %v1331 = vmul.f32 %v662, %v662
        %v1332 = vmul.f32 %v664, %v664
        %v1333 = vmul.f32 %v703, %v703
        %v1334 = vmul.f32 %v705, %v705
        %v1335 = vmul.f32 %v888, %v888
        %v1336 = vmul.f32 %v890, %v890
        %v1337 = vmul.f32 %v929, %v929
        %v1338 = vmul.f32 %v931, %v931
        %v1339 = vmul.f32 %v970, %v970
        %v1340 = vmul.f32 %v972, %v972
        %v1341 = vmul.f32 %v1011, %v1011
        %v1342 = vmul.f32 %v1013, %v1013
        %v1343 = vadd.f32 %v1327, %v1335
        %v1344 = vadd.f32 %v1328, %v1336
        %v1345 = vadd.f32 %v1329, %v1337
        %v1346 = vadd.f32 %v1330, %v1338
        %v1347 = vadd.f32 %v1331, %v1339
        %v1348 = vadd.f32 %v1332, %v1340
        %v1349 = vadd.f32 %v1333, %v1341
        %v1350 = vadd.f32 %v1334, %v1342
        %v1351 = vrsqrt.pop %v1343
        %v1352 = vmul.f32 %v1343, %v1351
        %vm1353 = vcmp.eq.f32.partialorder %v1343, inf
        %v1354 = vsel %vm1353, %v1343, %v1352
        %vm1355 = vcmp.eq.f32.partialorder %v1343, 0.0
        %v1356 = vand.u32 %v1343, 2147483648
        %v1357 = vsel %vm1355, %v1356, %v1354
        %v1358 = vrsqrt.pop %v1344
        %v1359 = vmul.f32 %v1344, %v1358
        %vm1360 = vcmp.eq.f32.partialorder %v1344, inf
        %v1361 = vsel %vm1360, %v1344, %v1359
        %vm1362 = vcmp.eq.f32.partialorder %v1344, 0.0
        %v1363 = vand.u32 %v1344, 2147483648
        %v1364 = vsel %vm1362, %v1363, %v1361
        %v1365 = vrsqrt.pop %v1345
        %v1366 = vmul.f32 %v1345, %v1365
        %vm1367 = vcmp.eq.f32.partialorder %v1345, inf
        %v1368 = vsel %vm1367, %v1345, %v1366
        %vm1369 = vcmp.eq.f32.partialorder %v1345, 0.0
        %v1370 = vand.u32 %v1345, 2147483648
        %v1371 = vsel %vm1369, %v1370, %v1368
        %v1372 = vrsqrt.pop %v1346
        %v1373 = vmul.f32 %v1346, %v1372
        %vm1374 = vcmp.eq.f32.partialorder %v1346, inf
        %v1375 = vsel %vm1374, %v1346, %v1373
        %vm1376 = vcmp.eq.f32.partialorder %v1346, 0.0
        %v1377 = vand.u32 %v1346, 2147483648
        %v1378 = vsel %vm1376, %v1377, %v1375
        %v1379 = vrsqrt.pop %v1347
        %v1380 = vmul.f32 %v1347, %v1379
        %vm1381 = vcmp.eq.f32.partialorder %v1347, inf
        %v1382 = vsel %vm1381, %v1347, %v1380
        %vm1383 = vcmp.eq.f32.partialorder %v1347, 0.0
        %v1384 = vand.u32 %v1347, 2147483648
        %v1385 = vsel %vm1383, %v1384, %v1382
        %v1386 = vrsqrt.pop %v1348
        %v1387 = vmul.f32 %v1348, %v1386
        %vm1388 = vcmp.eq.f32.partialorder %v1348, inf
        %v1389 = vsel %vm1388, %v1348, %v1387
        %vm1390 = vcmp.eq.f32.partialorder %v1348, 0.0
        %v1391 = vand.u32 %v1348, 2147483648
        %v1392 = vsel %vm1390, %v1391, %v1389
        %v1393 = vrsqrt.pop %v1349
        %v1394 = vmul.f32 %v1349, %v1393
        %vm1395 = vcmp.eq.f32.partialorder %v1349, inf
        %v1396 = vsel %vm1395, %v1349, %v1394
        %vm1397 = vcmp.eq.f32.partialorder %v1349, 0.0
        %v1398 = vand.u32 %v1349, 2147483648
        %v1399 = vsel %vm1397, %v1398, %v1396
        %v1400 = vrsqrt.pop %v1350
        %v1401 = vmul.f32 %v1350, %v1400
        %vm1402 = vcmp.eq.f32.partialorder %v1350, inf
        %v1403 = vsel %vm1402, %v1350, %v1401
        %vm1404 = vcmp.eq.f32.partialorder %v1350, 0.0
        %v1405 = vand.u32 %v1350, 2147483648
        %v1406 = vsel %vm1404, %v1405, %v1403
        %vm1407 = vcmp.lt.f32.partialorder %v888, 1e-08
        %vm1408 = vcmp.lt.f32.partialorder %v890, 1e-08
        %vm1409 = vcmp.lt.f32.partialorder %v929, 1e-08
        %vm1410 = vcmp.lt.f32.partialorder %v931, 1e-08
        %vm1411 = vcmp.lt.f32.partialorder %v970, 1e-08
        %vm1412 = vcmp.lt.f32.partialorder %v972, 1e-08
        %vm1413 = vcmp.lt.f32.partialorder %v1011, 1e-08
        %vm1414 = vcmp.lt.f32.partialorder %v1013, 1e-08
        %vm1415 = vcmp.gt.f32.partialorder %v888, -1e-08
        %vm1416 = vcmp.gt.f32.partialorder %v890, -1e-08
        %vm1417 = vcmp.gt.f32.partialorder %v929, -1e-08
        %vm1418 = vcmp.gt.f32.partialorder %v931, -1e-08
        %vm1419 = vcmp.gt.f32.partialorder %v970, -1e-08
        %vm1420 = vcmp.gt.f32.partialorder %v972, -1e-08
        %vm1421 = vcmp.gt.f32.partialorder %v1011, -1e-08
        %vm1422 = vcmp.gt.f32.partialorder %v1013, -1e-08
        %vm1423 = vmand %vm1407, %vm1415
        %vm1424 = vmand %vm1408, %vm1416
        %vm1425 = vmand %vm1409, %vm1417
        %vm1426 = vmand %vm1410, %vm1418
        %vm1427 = vmand %vm1411, %vm1419
        %vm1428 = vmand %vm1412, %vm1420
        %vm1429 = vmand %vm1413, %vm1421
        %vm1430 = vmand %vm1414, %vm1422
        %v1431 = vsel %vm1423, 1e-08, %v888
        %v1432 = vsel %vm1424, 1e-08, %v890
        %v1433 = vsel %vm1425, 1e-08, %v929
        %v1434 = vsel %vm1426, 1e-08, %v931
        %v1435 = vsel %vm1427, 1e-08, %v970
        %v1436 = vsel %vm1428, 1e-08, %v972
        %v1437 = vsel %vm1429, 1e-08, %v1011
        %v1438 = vsel %vm1430, 1e-08, %v1013
        %v1439 = vand.u32 2147483647, %v580
        %v1440 = vand.u32 2147483647, %v1431
        %v1441 = vmin.f32 %v1439, %v1440
        %v1442 = vmax.f32 %v1439, %v1440
        %v1443 = vrcp.pop %v1442
        %v1444 = vmul.f32 %v1441, %v1443
        %v1445 = vmul.f32 %v1444, %v1444
        %v1446 = vmul.f32 0.002785687, %v1445
        %v1447 = vadd.f32 %v1446, -0.015866
        %v1448 = vmul.f32 %v1447, %v1445
        %v1449 = vadd.f32 %v1448, 0.04247222
        %v1450 = vmul.f32 %v1449, %v1445
        %v1451 = vadd.f32 %v1450, -0.074975304
        %v1452 = vmul.f32 %v1451, %v1445
        %v1453 = vadd.f32 %v1452, 0.1064488
        %v1454 = vmul.f32 %v1453, %v1445
        %v1455 = vadd.f32 %v1454, -0.14207031
        %v1456 = vmul.f32 %v1455, %v1445
        %v1457 = vadd.f32 %v1456, 0.19993454
        %v1458 = vmul.f32 %v1457, %v1445
        %v1459 = vadd.f32 %v1458, -0.33333147
        %v1460 = vmul.f32 %v1459, %v1445
        %v1461 = vmul.f32 %v1460, %v1444
        %v1462 = vadd.f32 %v1461, %v1444
        %vm1463 = vcmp.gt.f32.partialorder %v1440, %v1439
        %v1464 = vsub.f32 1.5707964, %v1462
        %v1465 = vsel %vm1463, %v1464, %v1462
        %vm1466 = vcmp.lt.f32.partialorder %v580, 0.0
        %v1467 = vsub.f32 3.1415927, %v1465
        %v1468 = vsel %vm1466, %v1467, %v1465
        %vm1469 = vcmp.lt.s32.totalorder %v580, 0
        %v1470 = vsel %vm1469, 3.1415927, 0.0
        %vm1471 = vcmp.eq.f32.partialorder %v1431, 0.0
        %v1472 = vsel %vm1471, %v1470, %v1468
        %vm1473 = vcmp.ne.f32.partialorder %v580, %v580
        %vm1474 = vcmp.ne.f32.partialorder %v1431, %v1431
        %vm1475 = vmor %vm1473, %vm1474
        %v1476 = vsel %vm1475, nan, %v1472
        %vm1477 = vcmp.lt.f32.partialorder %v580, 0.0
        %v1478 = vsel %vm1477, 2.3561945, 0.7853982
        %vm1479 = vcmp.eq.s32.totalorder %v1439, inf
        %vm1480 = vcmp.eq.s32.totalorder %v1440, inf
        %vm1481 = vmand %vm1479, %vm1480
        %v1482 = vsel %vm1481, %v1478, %v1476
        %v1483 = vand.u32 2147483647, %v1482
        %v1484 = vand.u32 %v1431, 2147483648
        %v1485 = vor.u32 %v1483, %v1484
        %v1486 = vand.u32 2147483647, %v582
        %v1487 = vand.u32 2147483647, %v1432
        %v1488 = vmin.f32 %v1486, %v1487
        %v1489 = vmax.f32 %v1486, %v1487
        %v1490 = vrcp.pop %v1489
        %v1491 = vmul.f32 %v1488, %v1490
        %v1492 = vmul.f32 %v1491, %v1491
        %v1493 = vmul.f32 0.002785687, %v1492
        %v1494 = vadd.f32 %v1493, -0.015866
        %v1495 = vmul.f32 %v1494, %v1492
        %v1496 = vadd.f32 %v1495, 0.04247222
        %v1497 = vmul.f32 %v1496, %v1492
        %v1498 = vadd.f32 %v1497, -0.074975304
        %v1499 = vmul.f32 %v1498, %v1492
        %v1500 = vadd.f32 %v1499, 0.1064488
        %v1501 = vmul.f32 %v1500, %v1492
        %v1502 = vadd.f32 %v1501, -0.14207031
        %v1503 = vmul.f32 %v1502, %v1492
        %v1504 = vadd.f32 %v1503, 0.19993454
        %v1505 = vmul.f32 %v1504, %v1492
        %v1506 = vadd.f32 %v1505, -0.33333147
        %v1507 = vmul.f32 %v1506, %v1492
        %v1508 = vmul.f32 %v1507, %v1491
        %v1509 = vadd.f32 %v1508, %v1491
        %vm1510 = vcmp.gt.f32.partialorder %v1487, %v1486
        %v1511 = vsub.f32 1.5707964, %v1509
        %v1512 = vsel %vm1510, %v1511, %v1509
        %vm1513 = vcmp.lt.f32.partialorder %v582, 0.0
        %v1514 = vsub.f32 3.1415927, %v1512
        %v1515 = vsel %vm1513, %v1514, %v1512
        %vm1516 = vcmp.lt.s32.totalorder %v582, 0
        %v1517 = vsel %vm1516, 3.1415927, 0.0
        %vm1518 = vcmp.eq.f32.partialorder %v1432, 0.0
        %v1519 = vsel %vm1518, %v1517, %v1515
        %vm1520 = vcmp.ne.f32.partialorder %v582, %v582
        %vm1521 = vcmp.ne.f32.partialorder %v1432, %v1432
        %vm1522 = vmor %vm1520, %vm1521
        %v1523 = vsel %vm1522, nan, %v1519
        %vm1524 = vcmp.lt.f32.partialorder %v582, 0.0
        %v1525 = vsel %vm1524, 2.3561945, 0.7853982
        %vm1526 = vcmp.eq.s32.totalorder %v1486, inf
        %vm1527 = vcmp.eq.s32.totalorder %v1487, inf
        %vm1528 = vmand %vm1526, %vm1527
        %v1529 = vsel %vm1528, %v1525, %v1523
        %v1530 = vand.u32 2147483647, %v1529
        %v1531 = vand.u32 %v1432, 2147483648
        %v1532 = vor.u32 %v1530, %v1531
        %v1533 = vand.u32 2147483647, %v621
        %v1534 = vand.u32 2147483647, %v1433
        %v1535 = vmin.f32 %v1533, %v1534
        %v1536 = vmax.f32 %v1533, %v1534
        %v1537 = vrcp.pop %v1536
        %v1538 = vmul.f32 %v1535, %v1537
        %v1539 = vmul.f32 %v1538, %v1538
        %v1540 = vmul.f32 0.002785687, %v1539
        %v1541 = vadd.f32 %v1540, -0.015866
        %v1542 = vmul.f32 %v1541, %v1539
        %v1543 = vadd.f32 %v1542, 0.04247222
        %v1544 = vmul.f32 %v1543, %v1539
        %v1545 = vadd.f32 %v1544, -0.074975304
        %v1546 = vmul.f32 %v1545, %v1539
        %v1547 = vadd.f32 %v1546, 0.1064488
        %v1548 = vmul.f32 %v1547, %v1539
        %v1549 = vadd.f32 %v1548, -0.14207031
        %v1550 = vmul.f32 %v1549, %v1539
        %v1551 = vadd.f32 %v1550, 0.19993454
        %v1552 = vmul.f32 %v1551, %v1539
        %v1553 = vadd.f32 %v1552, -0.33333147
        %v1554 = vmul.f32 %v1553, %v1539
        %v1555 = vmul.f32 %v1554, %v1538
        %v1556 = vadd.f32 %v1555, %v1538
        %vm1557 = vcmp.gt.f32.partialorder %v1534, %v1533
        %v1558 = vsub.f32 1.5707964, %v1556
        %v1559 = vsel %vm1557, %v1558, %v1556
        %vm1560 = vcmp.lt.f32.partialorder %v621, 0.0
        %v1561 = vsub.f32 3.1415927, %v1559
        %v1562 = vsel %vm1560, %v1561, %v1559
        %vm1563 = vcmp.lt.s32.totalorder %v621, 0
        %v1564 = vsel %vm1563, 3.1415927, 0.0
        %vm1565 = vcmp.eq.f32.partialorder %v1433, 0.0
        %v1566 = vsel %vm1565, %v1564, %v1562
        %vm1567 = vcmp.ne.f32.partialorder %v621, %v621
        %vm1568 = vcmp.ne.f32.partialorder %v1433, %v1433
        %vm1569 = vmor %vm1567, %vm1568
        %v1570 = vsel %vm1569, nan, %v1566
        %vm1571 = vcmp.lt.f32.partialorder %v621, 0.0
        %v1572 = vsel %vm1571, 2.3561945, 0.7853982
        %vm1573 = vcmp.eq.s32.totalorder %v1533, inf
        %vm1574 = vcmp.eq.s32.totalorder %v1534, inf
        %vm1575 = vmand %vm1573, %vm1574
        %v1576 = vsel %vm1575, %v1572, %v1570
        %v1577 = vand.u32 2147483647, %v1576
        %v1578 = vand.u32 %v1433, 2147483648
        %v1579 = vor.u32 %v1577, %v1578
        %v1580 = vand.u32 2147483647, %v623
        %v1581 = vand.u32 2147483647, %v1434
        %v1582 = vmin.f32 %v1580, %v1581
        %v1583 = vmax.f32 %v1580, %v1581
        %v1584 = vrcp.pop %v1583
        %v1585 = vmul.f32 %v1582, %v1584
        %v1586 = vmul.f32 %v1585, %v1585
        %v1587 = vmul.f32 0.002785687, %v1586
        %v1588 = vadd.f32 %v1587, -0.015866
        %v1589 = vmul.f32 %v1588, %v1586
        %v1590 = vadd.f32 %v1589, 0.04247222
        %v1591 = vmul.f32 %v1590, %v1586
        %v1592 = vadd.f32 %v1591, -0.074975304
        %v1593 = vmul.f32 %v1592, %v1586
        %v1594 = vadd.f32 %v1593, 0.1064488
        %v1595 = vmul.f32 %v1594, %v1586
        %v1596 = vadd.f32 %v1595, -0.14207031
        %v1597 = vmul.f32 %v1596, %v1586
        %v1598 = vadd.f32 %v1597, 0.19993454
        %v1599 = vmul.f32 %v1598, %v1586
        %v1600 = vadd.f32 %v1599, -0.33333147
        %v1601 = vmul.f32 %v1600, %v1586
        %v1602 = vmul.f32 %v1601, %v1585
        %v1603 = vadd.f32 %v1602, %v1585
        %vm1604 = vcmp.gt.f32.partialorder %v1581, %v1580
        %v1605 = vsub.f32 1.5707964, %v1603
        %v1606 = vsel %vm1604, %v1605, %v1603
        %vm1607 = vcmp.lt.f32.partialorder %v623, 0.0
        %v1608 = vsub.f32 3.1415927, %v1606
        %v1609 = vsel %vm1607, %v1608, %v1606
        %vm1610 = vcmp.lt.s32.totalorder %v623, 0
        %v1611 = vsel %vm1610, 3.1415927, 0.0
        %vm1612 = vcmp.eq.f32.partialorder %v1434, 0.0
        %v1613 = vsel %vm1612, %v1611, %v1609
        %vm1614 = vcmp.ne.f32.partialorder %v623, %v623
        %vm1615 = vcmp.ne.f32.partialorder %v1434, %v1434
        %vm1616 = vmor %vm1614, %vm1615
        %v1617 = vsel %vm1616, nan, %v1613
        %vm1618 = vcmp.lt.f32.partialorder %v623, 0.0
        %v1619 = vsel %vm1618, 2.3561945, 0.7853982
        %vm1620 = vcmp.eq.s32.totalorder %v1580, inf
        %vm1621 = vcmp.eq.s32.totalorder %v1581, inf
        %vm1622 = vmand %vm1620, %vm1621
        %v1623 = vsel %vm1622, %v1619, %v1617
        %v1624 = vand.u32 2147483647, %v1623
        %v1625 = vand.u32 %v1434, 2147483648
        %v1626 = vor.u32 %v1624, %v1625
        %v1627 = vand.u32 2147483647, %v662
        %v1628 = vand.u32 2147483647, %v1435
        %v1629 = vmin.f32 %v1627, %v1628
        %v1630 = vmax.f32 %v1627, %v1628
        %v1631 = vrcp.pop %v1630
        %v1632 = vmul.f32 %v1629, %v1631
        %v1633 = vmul.f32 %v1632, %v1632
        %v1634 = vmul.f32 0.002785687, %v1633
        %v1635 = vadd.f32 %v1634, -0.015866
        %v1636 = vmul.f32 %v1635, %v1633
        %v1637 = vadd.f32 %v1636, 0.04247222
        %v1638 = vmul.f32 %v1637, %v1633
        %v1639 = vadd.f32 %v1638, -0.074975304
        %v1640 = vmul.f32 %v1639, %v1633
        %v1641 = vadd.f32 %v1640, 0.1064488
        %v1642 = vmul.f32 %v1641, %v1633
        %v1643 = vadd.f32 %v1642, -0.14207031
        %v1644 = vmul.f32 %v1643, %v1633
        %v1645 = vadd.f32 %v1644, 0.19993454
        %v1646 = vmul.f32 %v1645, %v1633
        %v1647 = vadd.f32 %v1646, -0.33333147
        %v1648 = vmul.f32 %v1647, %v1633
        %v1649 = vmul.f32 %v1648, %v1632
        %v1650 = vadd.f32 %v1649, %v1632
        %vm1651 = vcmp.gt.f32.partialorder %v1628, %v1627
        %v1652 = vsub.f32 1.5707964, %v1650
        %v1653 = vsel %vm1651, %v1652, %v1650
        %vm1654 = vcmp.lt.f32.partialorder %v662, 0.0
        %v1655 = vsub.f32 3.1415927, %v1653
        %v1656 = vsel %vm1654, %v1655, %v1653
        %vm1657 = vcmp.lt.s32.totalorder %v662, 0
        %v1658 = vsel %vm1657, 3.1415927, 0.0
        %vm1659 = vcmp.eq.f32.partialorder %v1435, 0.0
        %v1660 = vsel %vm1659, %v1658, %v1656
        %vm1661 = vcmp.ne.f32.partialorder %v662, %v662
        %vm1662 = vcmp.ne.f32.partialorder %v1435, %v1435
        %vm1663 = vmor %vm1661, %vm1662
        %v1664 = vsel %vm1663, nan, %v1660
        %vm1665 = vcmp.lt.f32.partialorder %v662, 0.0
        %v1666 = vsel %vm1665, 2.3561945, 0.7853982
        %vm1667 = vcmp.eq.s32.totalorder %v1627, inf
        %vm1668 = vcmp.eq.s32.totalorder %v1628, inf
        %vm1669 = vmand %vm1667, %vm1668
        %v1670 = vsel %vm1669, %v1666, %v1664
        %v1671 = vand.u32 2147483647, %v1670
        %v1672 = vand.u32 %v1435, 2147483648
        %v1673 = vor.u32 %v1671, %v1672
        %v1674 = vand.u32 2147483647, %v664
        %v1675 = vand.u32 2147483647, %v1436
        %v1676 = vmin.f32 %v1674, %v1675
        %v1677 = vmax.f32 %v1674, %v1675
        %v1678 = vrcp.pop %v1677
        %v1679 = vmul.f32 %v1676, %v1678
        %v1680 = vmul.f32 %v1679, %v1679
        %v1681 = vmul.f32 0.002785687, %v1680
        %v1682 = vadd.f32 %v1681, -0.015866
        %v1683 = vmul.f32 %v1682, %v1680
        %v1684 = vadd.f32 %v1683, 0.04247222
        %v1685 = vmul.f32 %v1684, %v1680
        %v1686 = vadd.f32 %v1685, -0.074975304
        %v1687 = vmul.f32 %v1686, %v1680
        %v1688 = vadd.f32 %v1687, 0.1064488
        %v1689 = vmul.f32 %v1688, %v1680
        %v1690 = vadd.f32 %v1689, -0.14207031
        %v1691 = vmul.f32 %v1690, %v1680
        %v1692 = vadd.f32 %v1691, 0.19993454
        %v1693 = vmul.f32 %v1692, %v1680
        %v1694 = vadd.f32 %v1693, -0.33333147
        %v1695 = vmul.f32 %v1694, %v1680
        %v1696 = vmul.f32 %v1695, %v1679
        %v1697 = vadd.f32 %v1696, %v1679
        %vm1698 = vcmp.gt.f32.partialorder %v1675, %v1674
        %v1699 = vsub.f32 1.5707964, %v1697
        %v1700 = vsel %vm1698, %v1699, %v1697
        %vm1701 = vcmp.lt.f32.partialorder %v664, 0.0
        %v1702 = vsub.f32 3.1415927, %v1700
        %v1703 = vsel %vm1701, %v1702, %v1700
        %vm1704 = vcmp.lt.s32.totalorder %v664, 0
        %v1705 = vsel %vm1704, 3.1415927, 0.0
        %vm1706 = vcmp.eq.f32.partialorder %v1436, 0.0
        %v1707 = vsel %vm1706, %v1705, %v1703
        %vm1708 = vcmp.ne.f32.partialorder %v664, %v664
        %vm1709 = vcmp.ne.f32.partialorder %v1436, %v1436
        %vm1710 = vmor %vm1708, %vm1709
        %v1711 = vsel %vm1710, nan, %v1707
        %vm1712 = vcmp.lt.f32.partialorder %v664, 0.0
        %v1713 = vsel %vm1712, 2.3561945, 0.7853982
        %vm1714 = vcmp.eq.s32.totalorder %v1674, inf
        %vm1715 = vcmp.eq.s32.totalorder %v1675, inf
        %vm1716 = vmand %vm1714, %vm1715
        %v1717 = vsel %vm1716, %v1713, %v1711
        %v1718 = vand.u32 2147483647, %v1717
        %v1719 = vand.u32 %v1436, 2147483648
        %v1720 = vor.u32 %v1718, %v1719
        %v1721 = vand.u32 2147483647, %v703
        %v1722 = vand.u32 2147483647, %v1437
        %v1723 = vmin.f32 %v1721, %v1722
        %v1724 = vmax.f32 %v1721, %v1722
        %v1725 = vrcp.pop %v1724
        %v1726 = vmul.f32 %v1723, %v1725
        %v1727 = vmul.f32 %v1726, %v1726
        %v1728 = vmul.f32 0.002785687, %v1727
        %v1729 = vadd.f32 %v1728, -0.015866
        %v1730 = vmul.f32 %v1729, %v1727
        %v1731 = vadd.f32 %v1730, 0.04247222
        %v1732 = vmul.f32 %v1731, %v1727
        %v1733 = vadd.f32 %v1732, -0.074975304
        %v1734 = vmul.f32 %v1733, %v1727
        %v1735 = vadd.f32 %v1734, 0.1064488
        %v1736 = vmul.f32 %v1735, %v1727
        %v1737 = vadd.f32 %v1736, -0.14207031
        %v1738 = vmul.f32 %v1737, %v1727
        %v1739 = vadd.f32 %v1738, 0.19993454
        %v1740 = vmul.f32 %v1739, %v1727
        %v1741 = vadd.f32 %v1740, -0.33333147
        %v1742 = vmul.f32 %v1741, %v1727
        %v1743 = vmul.f32 %v1742, %v1726
        %v1744 = vadd.f32 %v1743, %v1726
        %vm1745 = vcmp.gt.f32.partialorder %v1722, %v1721
        %v1746 = vsub.f32 1.5707964, %v1744
        %v1747 = vsel %vm1745, %v1746, %v1744
        %vm1748 = vcmp.lt.f32.partialorder %v703, 0.0
        %v1749 = vsub.f32 3.1415927, %v1747
        %v1750 = vsel %vm1748, %v1749, %v1747
        %vm1751 = vcmp.lt.s32.totalorder %v703, 0
        %v1752 = vsel %vm1751, 3.1415927, 0.0
        %vm1753 = vcmp.eq.f32.partialorder %v1437, 0.0
        %v1754 = vsel %vm1753, %v1752, %v1750
        %vm1755 = vcmp.ne.f32.partialorder %v703, %v703
        %vm1756 = vcmp.ne.f32.partialorder %v1437, %v1437
        %vm1757 = vmor %vm1755, %vm1756
        %v1758 = vsel %vm1757, nan, %v1754
        %vm1759 = vcmp.lt.f32.partialorder %v703, 0.0
        %v1760 = vsel %vm1759, 2.3561945, 0.7853982
        %vm1761 = vcmp.eq.s32.totalorder %v1721, inf
        %vm1762 = vcmp.eq.s32.totalorder %v1722, inf
        %vm1763 = vmand %vm1761, %vm1762
        %v1764 = vsel %vm1763, %v1760, %v1758
        %v1765 = vand.u32 2147483647, %v1764
        %v1766 = vand.u32 %v1437, 2147483648
        %v1767 = vor.u32 %v1765, %v1766
        %v1768 = vand.u32 2147483647, %v705
        %v1769 = vand.u32 2147483647, %v1438
        %v1770 = vmin.f32 %v1768, %v1769
        %v1771 = vmax.f32 %v1768, %v1769
        %v1772 = vrcp.pop %v1771
        %v1773 = vmul.f32 %v1770, %v1772
        %v1774 = vmul.f32 %v1773, %v1773
        %v1775 = vmul.f32 0.002785687, %v1774
        %v1776 = vadd.f32 %v1775, -0.015866
        %v1777 = vmul.f32 %v1776, %v1774
        %v1778 = vadd.f32 %v1777, 0.04247222
        %v1779 = vmul.f32 %v1778, %v1774
        %v1780 = vadd.f32 %v1779, -0.074975304
        %v1781 = vmul.f32 %v1780, %v1774
        %v1782 = vadd.f32 %v1781, 0.1064488
        %v1783 = vmul.f32 %v1782, %v1774
        %v1784 = vadd.f32 %v1783, -0.14207031
        %v1785 = vmul.f32 %v1784, %v1774
        %v1786 = vadd.f32 %v1785, 0.19993454
        %v1787 = vmul.f32 %v1786, %v1774
        %v1788 = vadd.f32 %v1787, -0.33333147
        %v1789 = vmul.f32 %v1788, %v1774
        %v1790 = vmul.f32 %v1789, %v1773
        %v1791 = vadd.f32 %v1790, %v1773
        %vm1792 = vcmp.gt.f32.partialorder %v1769, %v1768
        %v1793 = vsub.f32 1.5707964, %v1791
        %v1794 = vsel %vm1792, %v1793, %v1791
        %vm1795 = vcmp.lt.f32.partialorder %v705, 0.0
        %v1796 = vsub.f32 3.1415927, %v1794
        %v1797 = vsel %vm1795, %v1796, %v1794
        %vm1798 = vcmp.lt.s32.totalorder %v705, 0
        %v1799 = vsel %vm1798, 3.1415927, 0.0
        %vm1800 = vcmp.eq.f32.partialorder %v1438, 0.0
        %v1801 = vsel %vm1800, %v1799, %v1797
        %vm1802 = vcmp.ne.f32.partialorder %v705, %v705
        %vm1803 = vcmp.ne.f32.partialorder %v1438, %v1438
        %vm1804 = vmor %vm1802, %vm1803
        %v1805 = vsel %vm1804, nan, %v1801
        %vm1806 = vcmp.lt.f32.partialorder %v705, 0.0
        %v1807 = vsel %vm1806, 2.3561945, 0.7853982
        %vm1808 = vcmp.eq.s32.totalorder %v1768, inf
        %vm1809 = vcmp.eq.s32.totalorder %v1769, inf
        %vm1810 = vmand %vm1808, %vm1809
        %v1811 = vsel %vm1810, %v1807, %v1805
        %v1812 = vand.u32 2147483647, %v1811
        %v1813 = vand.u32 %v1438, 2147483648
        %v1814 = vor.u32 %v1812, %v1813
        %1816 = vset.pattern.permute.xlu0 0
        %1817 = vperm.xlu0 %1816, %v1326
        %v1818 = vpop.permute.xlu0 %1817
        %v1820 = vadd.f32 %v1485, %v1818
        %v1821 = vadd.f32 %v1532, %v1818
        %v1822 = vadd.f32 %v1579, %v1818
        %v1823 = vadd.f32 %v1626, %v1818
        %v1824 = vadd.f32 %v1673, %v1818
        %v1825 = vadd.f32 %v1720, %v1818
        %v1826 = vadd.f32 %v1767, %v1818
        %v1827 = vadd.f32 %v1814, %v1818
        %v1828 = vmul.f32 %v1357, 0.5
        %v1829 = vmul.f32 %v1364, 0.5
        %v1830 = vmul.f32 %v1371, 0.5
        %v1831 = vmul.f32 %v1378, 0.5
        %v1832 = vmul.f32 %v1385, 0.5
        %v1833 = vmul.f32 %v1392, 0.5
        %v1834 = vmul.f32 %v1399, 0.5
        %v1835 = vmul.f32 %v1406, 0.5
        %v1836 = vmul.f32 %v1196, 0.5
        %v1837 = vmul.f32 %v1198, 0.5
        %v1838 = vmul.f32 %v1237, 0.5
        %v1839 = vmul.f32 %v1239, 0.5
        %v1840 = vmul.f32 %v1278, 0.5
        %v1841 = vmul.f32 %v1280, 0.5
        %v1842 = vmul.f32 %v1319, 0.5
        %v1843 = vmul.f32 %v1321, 0.5
        %v1844 = vadd.f32 %v1828, %v1836
        %v1845 = vadd.f32 %v1829, %v1837
        %v1846 = vadd.f32 %v1830, %v1838
        %v1847 = vadd.f32 %v1831, %v1839
        %v1848 = vadd.f32 %v1832, %v1840
        %v1849 = vadd.f32 %v1833, %v1841
        %v1850 = vadd.f32 %v1834, %v1842
        %v1851 = vadd.f32 %v1835, %v1843
        %1853 = vset.pattern.permute.xlu0 0
        %1854 = vperm.xlu0 %1853, %v1325
        %v1855 = vpop.permute.xlu0 %1854
        %v1857 = vadd.f32 %v1844, %v1855
        %v1858 = vadd.f32 %v1845, %v1855
        %v1859 = vadd.f32 %v1846, %v1855
        %v1860 = vadd.f32 %v1847, %v1855
        %v1861 = vadd.f32 %v1848, %v1855
        %v1862 = vadd.f32 %v1849, %v1855
        %v1863 = vadd.f32 %v1850, %v1855
        %v1864 = vadd.f32 %v1851, %v1855
        %v1873 = vcombine.low %v1857, %v1858
        %v1874 = vcombine.low %v1859, %v1860
        %v1875 = vcombine.low %v1861, %v1862
        %v1876 = vcombine.low %v1863, %v1864
        %1881 = vst [vmem:[%s354] sm:$0xff] %v1873
        %1882 = vst [vmem:[%s354 + $0x8] sm:$0xff] %v1874
        %1883 = vst [vmem:[%s354 + $0x10] sm:$0xff] %v1875
        %1884 = vst [vmem:[%s354 + $0x18] sm:$0xff] %v1876
        %v1893 = vcombine.low %v1820, %v1821
        %v1894 = vcombine.low %v1822, %v1823
        %v1895 = vcombine.low %v1824, %v1825
        %v1896 = vcombine.low %v1826, %v1827
        %1901 = vst [vmem:[%s361] sm:$0xff] %v1893
        %1902 = vst [vmem:[%s361 + $0x8] sm:$0xff] %v1894
        %1903 = vst [vmem:[%s361 + $0x10] sm:$0xff] %v1895
        %1904 = vst [vmem:[%s361 + $0x18] sm:$0xff] %v1896
        %s1905 = sand.u32 %s194, 1
        %s1906 = scalar_lea.sflag [#allocation3], %s1905
        %s1907 = sand.u32 %s194, 1
        %s1908 = smul.addr %s1907, 32
        %s1909 = scalar_lea.vmem [#allocation2], %s1908
        %s1910 = sand.u32 %s222, 1
        %s1911 = scalar_lea.sflag [#allocation5], %s1910
        %s1912 = sand.u32 %s222, 1
        %s1913 = smul.addr %s1912, 32
        %s1914 = scalar_lea.vmem [#allocation4], %s1913
        // Predicated region
        $region45: #{tpu_custom_call.1} parent=43 // pred_check
          %p1915 = pneg %p204
        $region46: #{tpu_custom_call.1} parent=43 // pred_check_branch
          %1917 = sbr.rel (%p1915) target = $region48
        $region47: #{tpu_custom_call.1} parent=43 // pred_region
          %s1918 = smul.u32 8, %s30
          %s1920 = ssub.s32 512, 512
          %1921 = vsyncadd %s1906, %s1920
          %s1922 = smul.addr %s29, 8
          %s1923 = sadd.s32 %s1918, %s1922
          %s1924 = smul.addr %s1923, 64
          %s1925 = scalar_lea.hbm %s6, %s1924
          %s1927 = sshll.u32 %s1909, 4
          %s1928 = int_to_ptr.vmem [resolvable:$true] %s1927
          %1930 = dma.vmem_to_hbm [thread:$0]  %s1928, 512, %s1925, %s1906
        $region48: #{tpu_custom_call.1} parent=43 // pred_fallthru
          _
        // Predicated region
        $region49: #{tpu_custom_call.1} parent=43 // pred_check
          %p1931 = pneg %p232
        $region50: #{tpu_custom_call.1} parent=43 // pred_check_branch
          %1933 = sbr.rel (%p1931) target = $region52
        $region51: #{tpu_custom_call.1} parent=43 // pred_region
          %s1934 = smul.u32 8, %s30
          %s1936 = ssub.s32 512, 512
          %1937 = vsyncadd %s1911, %s1936
          %s1938 = smul.addr %s29, 8
          %s1939 = sadd.s32 %s1934, %s1938
          %s1940 = smul.addr %s1939, 64
          %s1941 = scalar_lea.hbm %s7, %s1940
          %s1943 = sshll.u32 %s1914, 4
          %s1944 = int_to_ptr.vmem [resolvable:$true] %s1943
          %1946 = dma.vmem_to_hbm [thread:$0]  %s1944, 512, %s1941, %s1911
        $region52: #{tpu_custom_call.1} parent=43 // pred_fallthru
          _
      $region44: #{tpu_custom_call.1} parent=5 // pred_fallthru
        _
      %p1947 = scmp.le.s32.totalorder 2, %s20
      // Predicated region
      $region53: #{tpu_custom_call.1} parent=5 // pred_check
        %p1948 = pneg %p1947
      $region54: #{tpu_custom_call.1} parent=5 // pred_check_branch
        %1950 = sbr.rel (%p1948) target = $region56
      $region55: #{tpu_custom_call.1} parent=5 // pred_region
        %s1951 = ssub.s32 %s20, 2
        // Predicated region
        $region57: #{tpu_custom_call.1} parent=55 // pred_check
          %p1952 = pneg %p210
        $region58: #{tpu_custom_call.1} parent=55 // pred_check_branch
          %1954 = sbr.rel (%p1952) target = $region60
        $region59: #{tpu_custom_call.1} parent=55 // pred_region
          %s1955 = sand.u32 %s195, 1
          %s1956 = scalar_lea.sflag [#allocation3], %s1955
          %s1957 = sand.u32 %s195, 1
          %s1958 = smul.addr %s1957, 32
          %s1959 = scalar_lea.vmem [#allocation2], %s1958
          %1960 = dma.done %s1956, 512
        $region60: #{tpu_custom_call.1} parent=55 // pred_fallthru
          _
        // Predicated region
        $region61: #{tpu_custom_call.1} parent=55 // pred_check
          %p1961 = pneg %p238
        $region62: #{tpu_custom_call.1} parent=55 // pred_check_branch
          %1963 = sbr.rel (%p1961) target = $region64
        $region63: #{tpu_custom_call.1} parent=55 // pred_region
          %s1964 = sand.u32 %s223, 1
          %s1965 = scalar_lea.sflag [#allocation5], %s1964
          %s1966 = sand.u32 %s223, 1
          %s1967 = smul.addr %s1966, 32
          %s1968 = scalar_lea.vmem [#allocation4], %s1967
          %1969 = dma.done %s1965, 512
        $region64: #{tpu_custom_call.1} parent=55 // pred_fallthru
          _
      $region56: #{tpu_custom_call.1} parent=5 // pred_fallthru
        _
    $region6: #{tpu_custom_call.1} parent=1 // loop_footer
      %s24 = sadd.s32 1, %s20
    $region7: #{tpu_custom_call.1} parent=1 // loop_footer_branch
      %19 = sbr.rel target = $region3
    $region8: #{tpu_custom_call.1} parent=1 // loop_exit
      _
    %1970 = vsyncpa [#allocation3], 1
    %s1971 = scalar_lea.sflag [#allocation3], 1
    %1972 = vsyncpa %s1971, 1
    %1973 = vsyncpa [#allocation5], 1
    %s1974 = scalar_lea.sflag [#allocation5], 1
    %1975 = vsyncpa %s1974, 1

</llo_original>
